<compile_context>
chip_gen: v7x
topology: tpu7x:2x2x1
jax: 0.10.0
libtpu: 0.0.40
codegen_flags: <defaults>
</compile_context>

<pallas_src>
import jax
import jax.numpy as jnp
from jax.experimental import pallas as pl
from jax.experimental.pallas import tpu as pltpu


LANE = 128          # TPU lane width; batch-tile alignment target for large B
_NEG_SLOPE = 0.01   # PyTorch nn.LeakyReLU default


def _round_up(x, m):
    return (x + m - 1) // m * m


def _leaky_relu(y, slope=_NEG_SLOPE):
    # For 0 < slope < 1: max(y, slope*y) == LeakyReLU(y). Cheaper than where().
    return jnp.maximum(y, slope * y)


# --------------------------------------------------------------------------- kernel

def mapping_net_kernel(x_ref,
                       w1_ref, b1_ref,
                       w2_ref, b2_ref,
                       w3_ref, b3_ref,
                       w4_ref, b4_ref,
                       o_ref):
    """Whole 4-layer MLP fused: all (bf16) weights resident in VMEM, one batch
    tile per grid step. bf16 operands, f32 MXU accumulate, f32 bias + LeakyReLU,
    bf16 inter-layer activations."""

    def layer(h_bf16, w_ref, b_ref, keep_bf16):
        y = jnp.dot(h_bf16, w_ref[...], preferred_element_type=jnp.float32)
        y = y + b_ref[...]                 # (1, out) broadcasts over batch tile
        y = _leaky_relu(y)
        return y.astype(jnp.bfloat16) if keep_bf16 else y

    h = x_ref[...]                          # already bf16
    h = layer(h, w1_ref, b1_ref, True)
    h = layer(h, w2_ref, b2_ref, True)
    h = layer(h, w3_ref, b3_ref, True)
    h = layer(h, w4_ref, b4_ref, False)     # last layer stays f32 for the output
    o_ref[...] = h.astype(o_ref.dtype)


# --------------------------------------------------------------------------- Buffered(1) feature probe

def _probe_kernel(w_ref, o_ref):
    o_ref[...] = w_ref[...]


_BUFFERED_SUPPORTED = None  # lazily probed once per process


def _buffered_supported():
    """Feature-detect pipeline_mode=pl.Buffered(1) once with a tiny kernel."""
    global _BUFFERED_SUPPORTED
    if _BUFFERED_SUPPORTED is None:
        try:
            spec = pl.BlockSpec((8, 128), lambda i: (0, 0),
                                pipeline_mode=pl.Buffered(1))
            fn = pl.pallas_call(
                _probe_kernel,
                out_shape=jax.ShapeDtypeStruct((8, 128), jnp.float32),
                grid_spec=pltpu.PrefetchScalarGridSpec(
                    num_scalar_prefetch=0,
                    grid=(1,),
                    in_specs=[spec],
                    out_specs=pl.BlockSpec((8, 128), lambda i: (0, 0)),
                ),
            )
            jax.block_until_ready(fn(jnp.zeros((8, 128), jnp.float32)))
            _BUFFERED_SUPPORTED = True
        except Exception:
            _BUFFERED_SUPPORTED = False
    return _BUFFERED_SUPPORTED


# --------------------------------------------------------------------------- wrapper

def _choose_tb(B):
    """Batch tile: small B -> one packing-aligned tile; large B -> big 128-aligned
    tiles but with >= 2 grid steps so v7x can use both TensorCores."""
    if B <= 128:
        return _round_up(max(B, 1), 16)      # single tile (bf16 sublane packing)
    half = _round_up(B, LANE) // 2
    return min(1024, max(128, (half // LANE) * LANE))


def _build_call(B, A, hidden, w_dim, tb, out_dtype, single_buffer_weights):
    grid = (pl.cdiv(B, tb),)

    def const_spec(shape):
        # Constant index_map across the grid -> weights/biases stay resident.
        if single_buffer_weights:
            return pl.BlockSpec(shape, lambda i: (0, 0),
                                pipeline_mode=pl.Buffered(1))
        return pl.BlockSpec(shape, lambda i: (0, 0))

    # Advisory cost estimate for XLA's scheduler.
    w_elems = A * hidden + 2 * hidden * hidden + hidden * w_dim
    flops = 2 * B * w_elems
    bytes_accessed = (B * A * 2                      # x (bf16)
                      + w_elems * 2                  # weights (bf16)
                      + (3 * hidden + w_dim) * 4     # biases (f32)
                      + B * w_dim * 4)               # output (f32)

    return pl.pallas_call(
        mapping_net_kernel,
        out_shape=jax.ShapeDtypeStruct((B, w_dim), out_dtype),
        grid_spec=pltpu.PrefetchScalarGridSpec(
            num_scalar_prefetch=0,
            grid=grid,
            in_specs=[
                pl.BlockSpec((tb, A), lambda i: (i, 0)),                 # x tile
                const_spec((A, hidden)), const_spec((1, hidden)),        # layer 1
                const_spec((hidden, hidden)), const_spec((1, hidden)),   # layer 2
                const_spec((hidden, hidden)), const_spec((1, hidden)),   # layer 3
                const_spec((hidden, w_dim)), const_spec((1, w_dim)),     # layer 4
            ],
            out_specs=pl.BlockSpec((tb, w_dim), lambda i: (i, 0)),
        ),
        compiler_params=pltpu.CompilerParams(
            dimension_semantics=("parallel",)),
        cost_estimate=pl.CostEstimate(
            flops=flops, transcendentals=0, bytes_accessed=bytes_accessed),
    )


def mapping_net(x, kparams, *, tb=None):
    """x: (B, action_size) float32 (or bf16).  kparams: output of prepare_params()."""
    B, A = x.shape
    A_w, hidden = kparams["w1"].shape
    assert A_w == A, (A_w, A)
    w_dim = kparams["w4"].shape[1]

    if tb is None:
        tb = _choose_tb(B)

    x_bf16 = x.astype(jnp.bfloat16)          # unpadded, lane dim == full A
    out_dtype = x.dtype if x.dtype == jnp.float32 else jnp.float32

    call = _build_call(B, A, hidden, w_dim, tb, out_dtype, _buffered_supported())
    return call(x_bf16,
                kparams["w1"], kparams["b1"],
                kparams["w2"], kparams["b2"],
                kparams["w3"], kparams["b3"],
                kparams["w4"], kparams["b4"])


# --------------------------------------------------------------------------- params

def init_params(key, action_size, w_dim=512, hidden=512):
    """f32 master params with nn.Linear-like uniform init; weights stored as
    (in_features, out_features) == transpose of PyTorch's (out, in)."""
    keys = jax.random.split(key, 8)
    dims = [(action_size, hidden), (hidden, hidden), (hidden, hidden), (hidden, w_dim)]
    params = {}
    for li, (fan_in, fan_out) in enumerate(dims, start=1):
        bound = 1.0 / jnp.sqrt(fan_in)
        params[f"w{li}"] = jax.random.uniform(
            keys[2 * (li - 1)], (fan_in, fan_out), jnp.float32, -bound, bound)
        params[f"b{li}"] = jax.random.uniform(
            keys[2 * (li - 1) + 1], (1, fan_out), jnp.float32, -bound, bound)
    return params


def prepare_params(params):
    """Cast weights to bf16 (keep biases f32). No contraction-dim padding."""
    kp = {}
    for li in (1, 2, 3, 4):
        kp[f"w{li}"] = params[f"w{li}"].astype(jnp.bfloat16)
        kp[f"b{li}"] = params[f"b{li}"].astype(jnp.float32)
    return kp


def mapping_net_ref(x, params):
    """Pure-JAX reference with the same numerics as the kernel
    (bf16 operands, f32 accumulate, f32 bias add + LeakyReLU)."""
    h = x.astype(jnp.float32)
    for li in range(1, 5):
        w = params[f"w{li}"].astype(jnp.bfloat16)
        h = jnp.dot(h.astype(jnp.bfloat16), w,
                    preferred_element_type=jnp.float32) + params[f"b{li}"]
        h = jnp.where(h >= 0, h, _NEG_SLOPE * h)
    return h


if __name__ == "__main__":
    key = jax.random.PRNGKey(0)
    k_param, k_x = jax.random.split(key)

    action_size = 16
    w_dim = 512
    B = 8            # small test batch; one (masked) 16-row tile

    params = init_params(k_param, action_size, w_dim=w_dim)
    kparams = prepare_params(params)
    x = jax.random.normal(k_x, (B, action_size), dtype=jnp.float32)

    out = mapping_net(x, kparams)
    out = jax.block_until_ready(out)

    ref = mapping_net_ref(x, params)
    assert out.shape == (B, w_dim), out.shape
    max_err = float(jnp.max(jnp.abs(out - ref)))
    assert jnp.allclose(out, ref, atol=1e-2, rtol=1e-2), \
        f"mismatch vs reference (max abs err {max_err})"

    print("KERNEL_OK")
</pallas_src>

<mosaic_0001>
module attributes {stable_mosaic.version = 11 : i64} {
  func.func @_probe_kernel(%arg0: i32, %arg1: memref<8x128xf32, #tpu.memory_space<vmem>>, %arg2: memref<8x128xf32, #tpu.memory_space<vmem>>) attributes {dimension_semantics = [#tpu.dimension_semantics<arbitrary>], iteration_bounds = array<i64: 1>, scalar_prefetch = 0 : i64, scratch_operands = 0 : i64, tpu.core_type = #tpu.core_type<tc>, window_params = [{pipeline_mode = #tpu.pipeline_mode<synchronous>, transform_indices = @transform_0, window_bounds = array<i64: 8, 128>}, {pipeline_mode = #tpu.pipeline_mode<synchronous>, transform_indices = @transform_1, window_bounds = array<i64: 8, 128>}]} {
    %c0 = arith.constant 0 : index
    %c0_0 = arith.constant 0 : index
    %0 = vector.load %arg1[%c0, %c0_0] : memref<8x128xf32, #tpu.memory_space<vmem>>, vector<8x128xf32>
    %c0_1 = arith.constant 0 : index
    %c0_2 = arith.constant 0 : index
    %1 = vector.load %arg2[%c0_1, %c0_2] : memref<8x128xf32, #tpu.memory_space<vmem>>, vector<8x128xf32>
    tpu.vector_store %arg2[%c0_1, %c0_2], %0 {strides = array<i32>} : memref<8x128xf32, #tpu.memory_space<vmem>>, vector<8x128xf32>,
    return
  }
  func.func @transform_0(%arg0: i32) -> (i32, i32) {
    %c0_i32 = arith.constant 0 : i32
    %c0_i32_0 = arith.constant 0 : i32
    %c0_i32_1 = arith.constant 0 : i32
    return %c0_i32, %c0_i32_0 : i32, i32
  }
  func.func @transform_1(%arg0: i32) -> (i32, i32) {
    %c0_i32 = arith.constant 0 : i32
    %c0_i32_0 = arith.constant 0 : i32
    %c0_i32_1 = arith.constant 0 : i32
    return %c0_i32, %c0_i32_0 : i32, i32
  }
}

module attributes {stable_mosaic.version = 11 : i64} {
  func.func @mapping_net_kernel(%arg0: i32, %arg1: memref<16x16xbf16, #tpu.memory_space<vmem>>, %arg2: memref<16x512xbf16, #tpu.memory_space<vmem>>, %arg3: memref<1x512xf32, #tpu.memory_space<vmem>>, %arg4: memref<512x512xbf16, #tpu.memory_space<vmem>>, %arg5: memref<1x512xf32, #tpu.memory_space<vmem>>, %arg6: memref<512x512xbf16, #tpu.memory_space<vmem>>, %arg7: memref<1x512xf32, #tpu.memory_space<vmem>>, %arg8: memref<512x512xbf16, #tpu.memory_space<vmem>>, %arg9: memref<1x512xf32, #tpu.memory_space<vmem>>, %arg10: memref<16x512xf32, #tpu.memory_space<vmem>>) attributes {dimension_semantics = [#tpu.dimension_semantics<parallel>], iteration_bounds = array<i64: 1>, scalar_prefetch = 0 : i64, scratch_operands = 0 : i64, tpu.core_type = #tpu.core_type<tc>, window_params = [{transform_indices = @transform_0, window_bounds = array<i64: 16, 16>}, {pipeline_mode = #tpu.pipeline_mode<synchronous>, transform_indices = @transform_1, window_bounds = array<i64: 16, 512>}, {pipeline_mode = #tpu.pipeline_mode<synchronous>, transform_indices = @transform_2, window_bounds = array<i64: 1, 512>}, {pipeline_mode = #tpu.pipeline_mode<synchronous>, transform_indices = @transform_3, window_bounds = array<i64: 512, 512>}, {pipeline_mode = #tpu.pipeline_mode<synchronous>, transform_indices = @transform_4, window_bounds = array<i64: 1, 512>}, {pipeline_mode = #tpu.pipeline_mode<synchronous>, transform_indices = @transform_5, window_bounds = array<i64: 512, 512>}, {pipeline_mode = #tpu.pipeline_mode<synchronous>, transform_indices = @transform_6, window_bounds = array<i64: 1, 512>}, {pipeline_mode = #tpu.pipeline_mode<synchronous>, transform_indices = @transform_7, window_bounds = array<i64: 512, 512>}, {pipeline_mode = #tpu.pipeline_mode<synchronous>, transform_indices = @transform_8, window_bounds = array<i64: 1, 512>}, {transform_indices = @transform_9, window_bounds = array<i64: 16, 512>}]} {
    %c0 = arith.constant 0 : index
    %c0_0 = arith.constant 0 : index
    %0 = vector.load %arg1[%c0, %c0_0] : memref<16x16xbf16, #tpu.memory_space<vmem>>, vector<16x16xbf16>
    %c0_1 = arith.constant 0 : index
    %c0_2 = arith.constant 0 : index
    %1 = vector.load %arg2[%c0_1, %c0_2] : memref<16x512xbf16, #tpu.memory_space<vmem>>, vector<16x512xbf16>
    %cst = arith.constant dense<0.000000e+00> : vector<16x512xf32>
    %2 = tpu.matmul %0, %1, %cst {dimension_numbers = #tpu.dot_dimension_numbers<[1], [0], [0], [1], [0, 0, 1, 1], [], []>} : vector<16x16xbf16>, vector<16x512xbf16>, vector<16x512xf32> -> vector<16x512xf32>
    %c0_3 = arith.constant 0 : index
    %c0_4 = arith.constant 0 : index
    %3 = vector.load %arg3[%c0_3, %c0_4] : memref<1x512xf32, #tpu.memory_space<vmem>>, vector<1x512xf32>
    %4 = vector.broadcast %3 : vector<1x512xf32> to vector<16x512xf32>
    %5 = arith.addf %2, %4 : vector<16x512xf32>
    %cst_5 = arith.constant 0.00999999977 : f32
    %6 = vector.broadcast %cst_5 : f32 to vector<16x512xf32>
    %7 = arith.mulf %6, %5 : vector<16x512xf32>
    %8 = arith.maximumf %5, %7 : vector<16x512xf32>
    %9 = arith.truncf %8 : vector<16x512xf32> to vector<16x512xbf16>
    %c0_6 = arith.constant 0 : index
    %c0_7 = arith.constant 0 : index
    %10 = vector.load %arg4[%c0_6, %c0_7] : memref<512x512xbf16, #tpu.memory_space<vmem>>, vector<512x512xbf16>
    %cst_8 = arith.constant dense<0.000000e+00> : vector<16x512xf32>
    %11 = tpu.matmul %9, %10, %cst_8 {dimension_numbers = #tpu.dot_dimension_numbers<[1], [0], [0], [1], [0, 0, 1, 1], [], []>} : vector<16x512xbf16>, vector<512x512xbf16>, vector<16x512xf32> -> vector<16x512xf32>
    %c0_9 = arith.constant 0 : index
    %c0_10 = arith.constant 0 : index
    %12 = vector.load %arg5[%c0_9, %c0_10] : memref<1x512xf32, #tpu.memory_space<vmem>>, vector<1x512xf32>
    %13 = vector.broadcast %12 : vector<1x512xf32> to vector<16x512xf32>
    %14 = arith.addf %11, %13 : vector<16x512xf32>
    %cst_11 = arith.constant 0.00999999977 : f32
    %15 = vector.broadcast %cst_11 : f32 to vector<16x512xf32>
    %16 = arith.mulf %15, %14 : vector<16x512xf32>
    %17 = arith.maximumf %14, %16 : vector<16x512xf32>
    %18 = arith.truncf %17 : vector<16x512xf32> to vector<16x512xbf16>
    %c0_12 = arith.constant 0 : index
    %c0_13 = arith.constant 0 : index
    %19 = vector.load %arg6[%c0_12, %c0_13] : memref<512x512xbf16, #tpu.memory_space<vmem>>, vector<512x512xbf16>
    %cst_14 = arith.constant dense<0.000000e+00> : vector<16x512xf32>
    %20 = tpu.matmul %18, %19, %cst_14 {dimension_numbers = #tpu.dot_dimension_numbers<[1], [0], [0], [1], [0, 0, 1, 1], [], []>} : vector<16x512xbf16>, vector<512x512xbf16>, vector<16x512xf32> -> vector<16x512xf32>
    %c0_15 = arith.constant 0 : index
    %c0_16 = arith.constant 0 : index
    %21 = vector.load %arg7[%c0_15, %c0_16] : memref<1x512xf32, #tpu.memory_space<vmem>>, vector<1x512xf32>
    %22 = vector.broadcast %21 : vector<1x512xf32> to vector<16x512xf32>
    %23 = arith.addf %20, %22 : vector<16x512xf32>
    %cst_17 = arith.constant 0.00999999977 : f32
    %24 = vector.broadcast %cst_17 : f32 to vector<16x512xf32>
    %25 = arith.mulf %24, %23 : vector<16x512xf32>
    %26 = arith.maximumf %23, %25 : vector<16x512xf32>
    %27 = arith.truncf %26 : vector<16x512xf32> to vector<16x512xbf16>
    %c0_18 = arith.constant 0 : index
    %c0_19 = arith.constant 0 : index
    %28 = vector.load %arg8[%c0_18, %c0_19] : memref<512x512xbf16, #tpu.memory_space<vmem>>, vector<512x512xbf16>
    %cst_20 = arith.constant dense<0.000000e+00> : vector<16x512xf32>
    %29 = tpu.matmul %27, %28, %cst_20 {dimension_numbers = #tpu.dot_dimension_numbers<[1], [0], [0], [1], [0, 0, 1, 1], [], []>} : vector<16x512xbf16>, vector<512x512xbf16>, vector<16x512xf32> -> vector<16x512xf32>
    %c0_21 = arith.constant 0 : index
    %c0_22 = arith.constant 0 : index
    %30 = vector.load %arg9[%c0_21, %c0_22] : memref<1x512xf32, #tpu.memory_space<vmem>>, vector<1x512xf32>
    %31 = vector.broadcast %30 : vector<1x512xf32> to vector<16x512xf32>
    %32 = arith.addf %29, %31 : vector<16x512xf32>
    %cst_23 = arith.constant 0.00999999977 : f32
    %33 = vector.broadcast %cst_23 : f32 to vector<16x512xf32>
    %34 = arith.mulf %33, %32 : vector<16x512xf32>
    %35 = arith.maximumf %32, %34 : vector<16x512xf32>
    %c0_24 = arith.constant 0 : index
    %c0_25 = arith.constant 0 : index
    %36 = vector.load %arg10[%c0_24, %c0_25] : memref<16x512xf32, #tpu.memory_space<vmem>>, vector<16x512xf32>
    tpu.vector_store %arg10[%c0_24, %c0_25], %35 {strides = array<i32>} : memref<16x512xf32, #tpu.memory_space<vmem>>, vector<16x512xf32>,
    return
  }
  func.func @transform_0(%arg0: i32) -> (i32, i32) {
    %c0_i32 = arith.constant 0 : i32
    %c0_i32_0 = arith.constant 0 : i32
    return %arg0, %c0_i32 : i32, i32
  }
  func.func @transform_1(%arg0: i32) -> (i32, i32) {
    %c0_i32 = arith.constant 0 : i32
    %c0_i32_0 = arith.constant 0 : i32
    %c0_i32_1 = arith.constant 0 : i32
    return %c0_i32, %c0_i32_0 : i32, i32
  }
  func.func @transform_2(%arg0: i32) -> (i32, i32) {
    %c0_i32 = arith.constant 0 : i32
    %c0_i32_0 = arith.constant 0 : i32
    %c0_i32_1 = arith.constant 0 : i32
    return %c0_i32, %c0_i32_0 : i32, i32
  }
  func.func @transform_3(%arg0: i32) -> (i32, i32) {
    %c0_i32 = arith.constant 0 : i32
    %c0_i32_0 = arith.constant 0 : i32
    %c0_i32_1 = arith.constant 0 : i32
    return %c0_i32, %c0_i32_0 : i32, i32
  }
  func.func @transform_4(%arg0: i32) -> (i32, i32) {
    %c0_i32 = arith.constant 0 : i32
    %c0_i32_0 = arith.constant 0 : i32
    %c0_i32_1 = arith.constant 0 : i32
    return %c0_i32, %c0_i32_0 : i32, i32
  }
  func.func @transform_5(%arg0: i32) -> (i32, i32) {
    %c0_i32 = arith.constant 0 : i32
    %c0_i32_0 = arith.constant 0 : i32
    %c0_i32_1 = arith.constant 0 : i32
    return %c0_i32, %c0_i32_0 : i32, i32
  }
  func.func @transform_6(%arg0: i32) -> (i32, i32) {
    %c0_i32 = arith.constant 0 : i32
    %c0_i32_0 = arith.constant 0 : i32
    %c0_i32_1 = arith.constant 0 : i32
    return %c0_i32, %c0_i32_0 : i32, i32
  }
  func.func @transform_7(%arg0: i32) -> (i32, i32) {
    %c0_i32 = arith.constant 0 : i32
    %c0_i32_0 = arith.constant 0 : i32
    %c0_i32_1 = arith.constant 0 : i32
    return %c0_i32, %c0_i32_0 : i32, i32
  }
  func.func @transform_8(%arg0: i32) -> (i32, i32) {
    %c0_i32 = arith.constant 0 : i32
    %c0_i32_0 = arith.constant 0 : i32
    %c0_i32_1 = arith.constant 0 : i32
    return %c0_i32, %c0_i32_0 : i32, i32
  }
  func.func @transform_9(%arg0: i32) -> (i32, i32) {
    %c0_i32 = arith.constant 0 : i32
    %c0_i32_0 = arith.constant 0 : i32
    return %arg0, %c0_i32 : i32, i32
  }
}

</mosaic_0001>

<llo_original>
// kernel: tpu_custom_call.1
$region0: #{tpu_custom_call.1}
  #allocation0 [shape = 'u32[]', space=smem, size = 0x4, offset = 0x4, fixed_abs, tag = 'smem constant byte address 0x4 - core index']
  #allocation1 [shape = 'u32[144,128]{1,0:T(1,128)}', space=vmem, size = 0x12000, scoped, tag = 'internal scratch']
  %s0 = inlined_call_operand.hbm [shape: f32[8,128], index: 0, kind: input, shape index: {}]
  %s1 = inlined_call_operand.hbm [shape: f32[8,128], index: 1, kind: output, shape index: {}]
  %s2 = sld [smem:[#allocation0]]
  $region18: #{tpu_custom_call.1} parent=0
    _
  %s4 = ssub.s32 1, %s2
  %s5 = scalar_select 0, %s4, %s2
  $region1: #{tpu_custom_call.1} parent=0
    #allocation2 [shape = 'u8[4096]{0}', space=vmem, size = 0x1000, scoped, tag = 'input window, operand 0, single buffered']
    #allocation3 [shape = 's32[1]{0}', space=sflag, size = 0x4, scoped, tag = 'scoped memory for tpu_custom_call.1']
    #allocation4 [shape = 's32[1]{0}', space=sflag, size = 0x4, scoped, tag = 'scoped memory for tpu_custom_call.1']
    #allocation5 [shape = 'u8[4096]{0}', space=vmem, size = 0x1000, scoped, tag = 'output window, operand 0, single buffered']
    %6 = vsyncpa [#allocation3], 0
    %7 = vsyncpa [#allocation4], 0
    // Predicated region
    $region2: #{tpu_custom_call.1} parent=1 // pred_check
      _
    $region3: #{tpu_custom_call.1} parent=1 // pred_check_branch
      %9 = sbr.rel (0) target = $region5
    $region4: #{tpu_custom_call.1} parent=1 // pred_region
      %s11 = ssub.s32 128, 128
      %12 = vsyncadd [#allocation3], %s11
      %s14 = sshll.u32 [#allocation2], 4
      %s15 = int_to_ptr.vmem [resolvable:$true] %s14
      %17 = dma.hbm_to_vmem [thread:$0]  %s0, 128, %s15, [#allocation3]
    $region5: #{tpu_custom_call.1} parent=1 // pred_fallthru
      _
    // Predicated region
    $region6: #{tpu_custom_call.1} parent=1 // pred_check
      _
    $region7: #{tpu_custom_call.1} parent=1 // pred_check_branch
      %19 = sbr.rel (0) target = $region9
    $region8: #{tpu_custom_call.1} parent=1 // pred_region
      %20 = dma.done [#allocation3], 128
    $region9: #{tpu_custom_call.1} parent=1 // pred_fallthru
      _
    %v21 = vld [vmem:[#allocation2] sm:$0xff]
    %22 = vst [vmem:[#allocation5] sm:$0xff] %v21
    // Predicated region
    $region10: #{tpu_custom_call.1} parent=1 // pred_check
      _
    $region11: #{tpu_custom_call.1} parent=1 // pred_check_branch
      %24 = sbr.rel (0) target = $region13
    $region12: #{tpu_custom_call.1} parent=1 // pred_region
      %s26 = ssub.s32 128, 128
      %27 = vsyncadd [#allocation4], %s26
      %s29 = sshll.u32 [#allocation5], 4
      %s30 = int_to_ptr.vmem [resolvable:$true] %s29
      %32 = dma.vmem_to_hbm [thread:$0]  %s30, 128, %s1, [#allocation4]
    $region13: #{tpu_custom_call.1} parent=1 // pred_fallthru
      _
    // Predicated region
    $region14: #{tpu_custom_call.1} parent=1 // pred_check
      _
    $region15: #{tpu_custom_call.1} parent=1 // pred_check_branch
      %34 = sbr.rel (0) target = $region17
    $region16: #{tpu_custom_call.1} parent=1 // pred_region
      %35 = dma.done [#allocation4], 128
    $region17: #{tpu_custom_call.1} parent=1 // pred_fallthru
      _
    %36 = vsyncpa [#allocation3], 1
    %37 = vsyncpa [#allocation4], 1

// kernel: tpu_custom_call.1
$region0: #{tpu_custom_call.1}
  #allocation0 [shape = 'u32[]', space=smem, size = 0x4, offset = 0x4, fixed_abs, tag = 'smem constant byte address 0x4 - core index']
  #allocation1 [shape = 'u32[144,128]{1,0:T(1,128)}', space=vmem, size = 0x12000, scoped, tag = 'internal scratch']
  %s0 = inlined_call_operand.hbm [shape: bf16[8,16], index: 0, kind: input, shape index: {}]
  %s1 = inlined_call_operand.hbm [shape: bf16[16,512], index: 1, kind: input, shape index: {}]
  %s2 = inlined_call_operand.vmem [shape: f32[1,512], index: 2, kind: input, shape index: {}]
  %s3 = inlined_call_operand.hbm [shape: bf16[512,512], index: 3, kind: input, shape index: {}]
  %s4 = inlined_call_operand.vmem [shape: f32[1,512], index: 4, kind: input, shape index: {}]
  %s5 = inlined_call_operand.hbm [shape: bf16[512,512], index: 5, kind: input, shape index: {}]
  %s6 = inlined_call_operand.vmem [shape: f32[1,512], index: 6, kind: input, shape index: {}]
  %s7 = inlined_call_operand.hbm [shape: bf16[512,512], index: 7, kind: input, shape index: {}]
  %s8 = inlined_call_operand.vmem [shape: f32[1,512], index: 8, kind: input, shape index: {}]
  %s9 = inlined_call_operand.hbm [shape: f32[8,512], index: 9, kind: output, shape index: {}]
  %s10 = sld [smem:[#allocation0]]
  $region66: #{tpu_custom_call.1} parent=0
    _
  %s12 = ssub.s32 1, %s10
  %s13 = scalar_select 0, %s12, %s10
  $region1: #{tpu_custom_call.1} parent=0
    #allocation2 [shape = 'u8[4096]{0}', space=vmem, size = 0x1000, scoped, tag = 'input window, operand 0, single buffered']
    #allocation3 [shape = 's32[1]{0}', space=sflag, size = 0x4, scoped, tag = 'scoped memory for tpu_custom_call.1']
    #allocation4 [shape = 's32[1]{0}', space=sflag, size = 0x4, scoped, tag = 'scoped memory for tpu_custom_call.1']
    #allocation5 [shape = 'u8[16384]{0}', space=vmem, size = 0x4000, scoped, tag = 'input window, operand 1, single buffered']
    #allocation6 [shape = 's32[1]{0}', space=sflag, size = 0x4, scoped, tag = 'scoped memory for tpu_custom_call.1']
    #allocation7 [shape = 'u8[524288]{0}', space=vmem, size = 0x80000, scoped, tag = 'input window, operand 3, single buffered']
    #allocation8 [shape = 'u8[524288]{0}', space=vmem, size = 0x80000, scoped, tag = 'input window, operand 5, single buffered']
    #allocation9 [shape = 's32[1]{0}', space=sflag, size = 0x4, scoped, tag = 'scoped memory for tpu_custom_call.1']
    #allocation10 [shape = 'u8[524288]{0}', space=vmem, size = 0x80000, scoped, tag = 'input window, operand 7, single buffered']
    #allocation11 [shape = 'u8[32768]{0}', space=vmem, size = 0x8000, scoped, tag = 'output window, operand 0, single buffered']
    %14 = vsyncpa [#allocation3], 0
    %15 = vsyncpa [#allocation6], 0
    %16 = vsyncpa [#allocation9], 0
    %17 = vsyncpa [#allocation4], 0
    // Predicated region
    $region2: #{tpu_custom_call.1} parent=1 // pred_check
      _
    $region3: #{tpu_custom_call.1} parent=1 // pred_check_branch
      %19 = sbr.rel (0) target = $region5
    $region4: #{tpu_custom_call.1} parent=1 // pred_region
      %s21 = ssub.s32 128, 64
      %22 = vsyncadd [#allocation3], %s21
      %s23 = sshll.u32 [#allocation2], 4
      %s24 = int_to_ptr.vmem [resolvable:$true] %s23
      %29 = dma.hbm_to_vmem [thread:$0]  %s0, 64, %s24, [#allocation3], 64, 64, 4
    $region5: #{tpu_custom_call.1} parent=1 // pred_fallthru
      _
    // Predicated region
    $region6: #{tpu_custom_call.1} parent=1 // pred_check
      _
    $region7: #{tpu_custom_call.1} parent=1 // pred_check_branch
      %31 = sbr.rel (0) target = $region9
    $region8: #{tpu_custom_call.1} parent=1 // pred_region
      %s33 = ssub.s32 512, 512
      %34 = vsyncadd [#allocation6], %s33
      %s35 = sshll.u32 [#allocation5], 4
      %s36 = int_to_ptr.vmem [resolvable:$true] %s35
      %41 = dma.hbm_to_vmem [thread:$0]  %s1, 512, %s36, [#allocation6], 256, 256, 16
    $region9: #{tpu_custom_call.1} parent=1 // pred_fallthru
      _
    // Predicated region
    $region10: #{tpu_custom_call.1} parent=1 // pred_check
      _
    $region11: #{tpu_custom_call.1} parent=1 // pred_check_branch
      %43 = sbr.rel (0) target = $region13
    $region12: #{tpu_custom_call.1} parent=1 // pred_region
      _
    $region13: #{tpu_custom_call.1} parent=1 // pred_fallthru
      _
    // Predicated region
    $region14: #{tpu_custom_call.1} parent=1 // pred_check
      _
    $region15: #{tpu_custom_call.1} parent=1 // pred_check_branch
      %45 = sbr.rel (0) target = $region17
    $region16: #{tpu_custom_call.1} parent=1 // pred_region
      %s47 = ssub.s32 16384, 16384
      %48 = vsyncadd [#allocation6], %s47
      %s49 = sshll.u32 [#allocation7], 4
      %s50 = int_to_ptr.vmem [resolvable:$true] %s49
      %55 = dma.hbm_to_vmem [thread:$0]  %s3, 16384, %s50, [#allocation6], 256, 256, 16
    $region17: #{tpu_custom_call.1} parent=1 // pred_fallthru
      _
    // Predicated region
    $region18: #{tpu_custom_call.1} parent=1 // pred_check
      _
    $region19: #{tpu_custom_call.1} parent=1 // pred_check_branch
      %57 = sbr.rel (0) target = $region21
    $region20: #{tpu_custom_call.1} parent=1 // pred_region
      _
    $region21: #{tpu_custom_call.1} parent=1 // pred_fallthru
      _
    // Predicated region
    $region22: #{tpu_custom_call.1} parent=1 // pred_check
      _
    $region23: #{tpu_custom_call.1} parent=1 // pred_check_branch
      %59 = sbr.rel (0) target = $region25
    $region24: #{tpu_custom_call.1} parent=1 // pred_region
      %s61 = ssub.s32 16384, 16384
      %62 = vsyncadd [#allocation9], %s61
      %s63 = sshll.u32 [#allocation8], 4
      %s64 = int_to_ptr.vmem [resolvable:$true] %s63
      %69 = dma.hbm_to_vmem [thread:$0]  %s5, 16384, %s64, [#allocation9], 256, 256, 16
    $region25: #{tpu_custom_call.1} parent=1 // pred_fallthru
      _
    // Predicated region
    $region26: #{tpu_custom_call.1} parent=1 // pred_check
      _
    $region27: #{tpu_custom_call.1} parent=1 // pred_check_branch
      %71 = sbr.rel (0) target = $region29
    $region28: #{tpu_custom_call.1} parent=1 // pred_region
      _
    $region29: #{tpu_custom_call.1} parent=1 // pred_fallthru
      _
    // Predicated region
    $region30: #{tpu_custom_call.1} parent=1 // pred_check
      _
    $region31: #{tpu_custom_call.1} parent=1 // pred_check_branch
      %73 = sbr.rel (0) target = $region33
    $region32: #{tpu_custom_call.1} parent=1 // pred_region
      %s75 = ssub.s32 16384, 16384
      %76 = vsyncadd [#allocation9], %s75
      %s77 = sshll.u32 [#allocation10], 4
      %s78 = int_to_ptr.vmem [resolvable:$true] %s77
      %83 = dma.hbm_to_vmem [thread:$0]  %s7, 16384, %s78, [#allocation9], 256, 256, 16
    $region33: #{tpu_custom_call.1} parent=1 // pred_fallthru
      _
    // Predicated region
    $region34: #{tpu_custom_call.1} parent=1 // pred_check
      _
    $region35: #{tpu_custom_call.1} parent=1 // pred_check_branch
      %85 = sbr.rel (0) target = $region37
    $region36: #{tpu_custom_call.1} parent=1 // pred_region
      _
    $region37: #{tpu_custom_call.1} parent=1 // pred_fallthru
      _
    // Predicated region
    $region38: #{tpu_custom_call.1} parent=1 // pred_check
      _
    $region39: #{tpu_custom_call.1} parent=1 // pred_check_branch
      %87 = sbr.rel (0) target = $region41
    $region40: #{tpu_custom_call.1} parent=1 // pred_region
      %88 = dma.done [#allocation3], 128
    $region41: #{tpu_custom_call.1} parent=1 // pred_fallthru
      _
    // Predicated region
    $region42: #{tpu_custom_call.1} parent=1 // pred_check
      _
    $region43: #{tpu_custom_call.1} parent=1 // pred_check_branch
      %90 = sbr.rel (0) target = $region45
    $region44: #{tpu_custom_call.1} parent=1 // pred_region
      %91 = dma.done [#allocation6], 512
    $region45: #{tpu_custom_call.1} parent=1 // pred_fallthru
      _
    // Predicated region
    $region46: #{tpu_custom_call.1} parent=1 // pred_check
      _
    $region47: #{tpu_custom_call.1} parent=1 // pred_check_branch
      %93 = sbr.rel (0) target = $region49
    $region48: #{tpu_custom_call.1} parent=1 // pred_region
      %94 = dma.done [#allocation6], 16384
    $region49: #{tpu_custom_call.1} parent=1 // pred_fallthru
      _
    // Predicated region
    $region50: #{tpu_custom_call.1} parent=1 // pred_check
      _
    $region51: #{tpu_custom_call.1} parent=1 // pred_check_branch
      %96 = sbr.rel (0) target = $region53
    $region52: #{tpu_custom_call.1} parent=1 // pred_region
      %97 = dma.done [#allocation9], 16384
    $region53: #{tpu_custom_call.1} parent=1 // pred_fallthru
      _
    // Predicated region
    $region54: #{tpu_custom_call.1} parent=1 // pred_check
      _
    $region55: #{tpu_custom_call.1} parent=1 // pred_check_branch
      %99 = sbr.rel (0) target = $region57
    $region56: #{tpu_custom_call.1} parent=1 // pred_region
      %100 = dma.done [#allocation9], 16384
    $region57: #{tpu_custom_call.1} parent=1 // pred_fallthru
      _
    %v102 = vld [vmem:[#allocation2] sm:$0xf]
    %v103 = vld [vmem:[#allocation2 + $0x4] sm:$0xf]
    %v104 = vld [vmem:[#allocation5] sm:$0xff]
    %v105 = vld [vmem:[#allocation5 + $0x8] sm:$0xff]
    %v106 = vld [vmem:[#allocation5 + $0x10] sm:$0xff]
    %v107 = vld [vmem:[#allocation5 + $0x18] sm:$0xff]
    %v108 = vld [vmem:[%s2] sm:$0xf]
    %v110 = vlaneseq
    %v111 = vshrl.u32 %v110, 7
    %v112 = vsub.s32 0, %v111
    %v113 = vrot.slane %v108, %v112
    %v114 = vlaneseq
    %v115 = vshrl.u32 %v114, 7
    %v116 = vsub.s32 1, %v115
    %v117 = vrot.slane %v108, %v116
    %v118 = vlaneseq
    %v119 = vshrl.u32 %v118, 7
    %v120 = vsub.s32 2, %v119
    %v121 = vrot.slane %v108, %v120
    %v122 = vlaneseq
    %v123 = vshrl.u32 %v122, 7
    %v124 = vsub.s32 3, %v123
    %v125 = vrot.slane %v108, %v124
    %v132 = vunpack.c.l.b16 %v102
    %v133 = vunpack.c.l.b16 %v103
    %v134 = vpack.c.b16 %v133, %v132
    %v139 = vunpack.c.l.b16 %v104
    %v140 = vunpack.c.h.b16 %v104
    %v141 = vunpack.c.l.b16 %v105
    %v142 = vunpack.c.h.b16 %v105
    %v143 = vunpack.c.l.b16 %v106
    %v144 = vunpack.c.h.b16 %v106
    %v145 = vunpack.c.l.b16 %v107
    %v146 = vunpack.c.h.b16 %v107
    %v147 = vpack.c.b16 %v143, %v139
    %v148 = vpack.c.b16 %v144, %v140
    %v149 = vpack.c.b16 %v145, %v141
    %v150 = vpack.c.b16 %v146, %v142
    %vm155 = vcmask 130048
    %v157 = vsel %vm155, %v134, 0
    %159 = vmatprep.subr.bf16.mxu0 %v148
    %160 = vmatpush1.bf16.msra.mxu0 %v147
    %161 = vmatprep.subr.bf16.mxu0 0
    %162 = vmatpush1.bf16.msra.mxu0 0
    %163 = vmatprep.subr.bf16.mxu0 0
    %164 = vmatpush1.bf16.msra.mxu0 0
    %165 = vmatprep.subr.bf16.mxu0 0
    %166 = vmatpush1.bf16.msra.mxu0 0
    %167 = vmatprep.subr.bf16.mxu0 0
    %168 = vmatpush1.bf16.msra.mxu0 0
    %169 = vmatprep.subr.bf16.mxu0 0
    %170 = vmatpush1.bf16.msra.mxu0 0
    %171 = vmatprep.subr.bf16.mxu0 0
    %172 = vmatpush1.bf16.msra.mxu0 0
    %173 = vmatprep.subr.bf16.mxu0 0
    %174 = vmatpush1.bf16.msra.mxu0 0
    %175 = vmatprep.subr.bf16.mxu0 0
    %176 = vmatpush1.bf16.msra.mxu0 0
    %177 = vmatprep.subr.bf16.mxu0 0
    %178 = vmatpush1.bf16.msra.mxu0 0
    %179 = vmatprep.subr.bf16.mxu0 0
    %180 = vmatpush1.bf16.msra.mxu0 0
    %181 = vmatprep.subr.bf16.mxu0 0
    %182 = vmatpush1.bf16.msra.mxu0 0
    %183 = vmatprep.subr.bf16.mxu0 0
    %184 = vmatpush1.bf16.msra.mxu0 0
    %185 = vmatprep.subr.bf16.mxu0 0
    %186 = vmatpush1.bf16.msra.mxu0 0
    %187 = vmatprep.subr.bf16.mxu0 0
    %188 = vmatpush1.bf16.msra.mxu0 0
    %189 = vmatprep.subr.bf16.mxu0 0
    %190 = vmatpush1.bf16.msra.mxu0 0
    %191 = vmatprep.mubr.bf16.mxu0 0
    %192 = vmatmul.mubr.bf16.gmra.mrb[0].mxu0 %v157
    %v193 = vpop.f32.mrb[0].mxu0
    %v194 = vadd.f32 %v113, %v193
    %v195 = vpop.f32.mrb[0].mxu0
    %v196 = vadd.f32 %v117, %v195
    %v197 = vpop.f32.mrb[0].mxu0
    %v198 = vadd.f32 %v113, %v197
    %v199 = vpop.f32.mrb[0].mxu0
    %v200 = vadd.f32 %v117, %v199
    %201 = vdwg.mxu0
    %202 = vmatprep.subr.bf16.mxu0 %v150
    %203 = vmatpush1.bf16.msra.mxu0 %v149
    %204 = vmatprep.subr.bf16.mxu0 0
    %205 = vmatpush1.bf16.msra.mxu0 0
    %206 = vmatprep.subr.bf16.mxu0 0
    %207 = vmatpush1.bf16.msra.mxu0 0
    %208 = vmatprep.subr.bf16.mxu0 0
    %209 = vmatpush1.bf16.msra.mxu0 0
    %210 = vmatprep.subr.bf16.mxu0 0
    %211 = vmatpush1.bf16.msra.mxu0 0
    %212 = vmatprep.subr.bf16.mxu0 0
    %213 = vmatpush1.bf16.msra.mxu0 0
    %214 = vmatprep.subr.bf16.mxu0 0
    %215 = vmatpush1.bf16.msra.mxu0 0
    %216 = vmatprep.subr.bf16.mxu0 0
    %217 = vmatpush1.bf16.msra.mxu0 0
    %218 = vmatprep.subr.bf16.mxu0 0
    %219 = vmatpush1.bf16.msra.mxu0 0
    %220 = vmatprep.subr.bf16.mxu0 0
    %221 = vmatpush1.bf16.msra.mxu0 0
    %222 = vmatprep.subr.bf16.mxu0 0
    %223 = vmatpush1.bf16.msra.mxu0 0
    %224 = vmatprep.subr.bf16.mxu0 0
    %225 = vmatpush1.bf16.msra.mxu0 0
    %226 = vmatprep.subr.bf16.mxu0 0
    %227 = vmatpush1.bf16.msra.mxu0 0
    %228 = vmatprep.subr.bf16.mxu0 0
    %229 = vmatpush1.bf16.msra.mxu0 0
    %230 = vmatprep.subr.bf16.mxu0 0
    %231 = vmatpush1.bf16.msra.mxu0 0
    %232 = vmatprep.subr.bf16.mxu0 0
    %233 = vmatpush1.bf16.msra.mxu0 0
    %234 = vmatprep.mubr.bf16.mxu0 0
    %235 = vmatmul.mubr.bf16.gmra.mrb[0].mxu0 %v157
    %v236 = vpop.f32.mrb[0].mxu0
    %v237 = vadd.f32 %v121, %v236
    %v238 = vpop.f32.mrb[0].mxu0
    %v239 = vadd.f32 %v125, %v238
    %v240 = vpop.f32.mrb[0].mxu0
    %v241 = vadd.f32 %v121, %v240
    %v242 = vpop.f32.mrb[0].mxu0
    %v243 = vadd.f32 %v125, %v242
    %244 = vdwg.mxu0
    %v245 = vmul.f32 %v194, 0.01
    %v246 = vmul.f32 %v196, 0.01
    %v247 = vmul.f32 %v237, 0.01
    %v248 = vmul.f32 %v239, 0.01
    %v249 = vmul.f32 %v198, 0.01
    %v250 = vmul.f32 %v200, 0.01
    %v251 = vmul.f32 %v241, 0.01
    %v252 = vmul.f32 %v243, 0.01
    %v253 = vmax.f32 %v194, %v245
    %v254 = vmax.f32 %v196, %v246
    %v255 = vmax.f32 %v237, %v247
    %v256 = vmax.f32 %v239, %v248
    %v257 = vmax.f32 %v198, %v249
    %v258 = vmax.f32 %v200, %v250
    %v259 = vmax.f32 %v241, %v251
    %v260 = vmax.f32 %v243, %v252
    %v261 = vpack.c.bf16 %v257, %v253
    %v262 = vpack.c.bf16 %v258, %v254
    %v263 = vpack.c.bf16 %v259, %v255
    %v264 = vpack.c.bf16 %v260, %v256
    %v265 = vld [vmem:[#allocation7] sm:$0xff]
    %v266 = vld [vmem:[#allocation7 + $0x8] sm:$0xff]
    %v267 = vld [vmem:[#allocation7 + $0x10] sm:$0xff]
    %v268 = vld [vmem:[#allocation7 + $0x18] sm:$0xff]
    %v269 = vld [vmem:[#allocation7 + $0x20] sm:$0xff]
    %v270 = vld [vmem:[#allocation7 + $0x28] sm:$0xff]
    %v271 = vld [vmem:[#allocation7 + $0x30] sm:$0xff]
    %v272 = vld [vmem:[#allocation7 + $0x38] sm:$0xff]
    %v273 = vld [vmem:[#allocation7 + $0x40] sm:$0xff]
    %v274 = vld [vmem:[#allocation7 + $0x48] sm:$0xff]
    %v275 = vld [vmem:[#allocation7 + $0x50] sm:$0xff]
    %v276 = vld [vmem:[#allocation7 + $0x58] sm:$0xff]
    %v277 = vld [vmem:[#allocation7 + $0x60] sm:$0xff]
    %v278 = vld [vmem:[#allocation7 + $0x68] sm:$0xff]
    %v279 = vld [vmem:[#allocation7 + $0x70] sm:$0xff]
    %v280 = vld [vmem:[#allocation7 + $0x78] sm:$0xff]
    %v281 = vld [vmem:[#allocation7 + $0x80] sm:$0xff]
    %v282 = vld [vmem:[#allocation7 + $0x88] sm:$0xff]
    %v283 = vld [vmem:[#allocation7 + $0x90] sm:$0xff]
    %v284 = vld [vmem:[#allocation7 + $0x98] sm:$0xff]
    %v285 = vld [vmem:[#allocation7 + $0xa0] sm:$0xff]
    %v286 = vld [vmem:[#allocation7 + $0xa8] sm:$0xff]
    %v287 = vld [vmem:[#allocation7 + $0xb0] sm:$0xff]
    %v288 = vld [vmem:[#allocation7 + $0xb8] sm:$0xff]
    %v289 = vld [vmem:[#allocation7 + $0xc0] sm:$0xff]
    %v290 = vld [vmem:[#allocation7 + $0xc8] sm:$0xff]
    %v291 = vld [vmem:[#allocation7 + $0xd0] sm:$0xff]
    %v292 = vld [vmem:[#allocation7 + $0xd8] sm:$0xff]
    %v293 = vld [vmem:[#allocation7 + $0xe0] sm:$0xff]
    %v294 = vld [vmem:[#allocation7 + $0xe8] sm:$0xff]
    %v295 = vld [vmem:[#allocation7 + $0xf0] sm:$0xff]
    %v296 = vld [vmem:[#allocation7 + $0xf8] sm:$0xff]
    %v297 = vld [vmem:[#allocation7 + $0x100] sm:$0xff]
    %v298 = vld [vmem:[#allocation7 + $0x108] sm:$0xff]
    %v299 = vld [vmem:[#allocation7 + $0x110] sm:$0xff]
    %v300 = vld [vmem:[#allocation7 + $0x118] sm:$0xff]
    %v301 = vld [vmem:[#allocation7 + $0x120] sm:$0xff]
    %v302 = vld [vmem:[#allocation7 + $0x128] sm:$0xff]
    %v303 = vld [vmem:[#allocation7 + $0x130] sm:$0xff]
    %v304 = vld [vmem:[#allocation7 + $0x138] sm:$0xff]
    %v305 = vld [vmem:[#allocation7 + $0x140] sm:$0xff]
    %v306 = vld [vmem:[#allocation7 + $0x148] sm:$0xff]
    %v307 = vld [vmem:[#allocation7 + $0x150] sm:$0xff]
    %v308 = vld [vmem:[#allocation7 + $0x158] sm:$0xff]
    %v309 = vld [vmem:[#allocation7 + $0x160] sm:$0xff]
    %v310 = vld [vmem:[#allocation7 + $0x168] sm:$0xff]
    %v311 = vld [vmem:[#allocation7 + $0x170] sm:$0xff]
    %v312 = vld [vmem:[#allocation7 + $0x178] sm:$0xff]
    %v313 = vld [vmem:[#allocation7 + $0x180] sm:$0xff]
    %v314 = vld [vmem:[#allocation7 + $0x188] sm:$0xff]
    %v315 = vld [vmem:[#allocation7 + $0x190] sm:$0xff]
    %v316 = vld [vmem:[#allocation7 + $0x198] sm:$0xff]
    %v317 = vld [vmem:[#allocation7 + $0x1a0] sm:$0xff]
    %v318 = vld [vmem:[#allocation7 + $0x1a8] sm:$0xff]
    %v319 = vld [vmem:[#allocation7 + $0x1b0] sm:$0xff]
    %v320 = vld [vmem:[#allocation7 + $0x1b8] sm:$0xff]
    %v321 = vld [vmem:[#allocation7 + $0x1c0] sm:$0xff]
    %v322 = vld [vmem:[#allocation7 + $0x1c8] sm:$0xff]
    %v323 = vld [vmem:[#allocation7 + $0x1d0] sm:$0xff]
    %v324 = vld [vmem:[#allocation7 + $0x1d8] sm:$0xff]
    %v325 = vld [vmem:[#allocation7 + $0x1e0] sm:$0xff]
    %v326 = vld [vmem:[#allocation7 + $0x1e8] sm:$0xff]
    %v327 = vld [vmem:[#allocation7 + $0x1f0] sm:$0xff]
    %v328 = vld [vmem:[#allocation7 + $0x1f8] sm:$0xff]
    %v329 = vld [vmem:[#allocation7 + $0x200] sm:$0xff]
    %v330 = vld [vmem:[#allocation7 + $0x208] sm:$0xff]
    %v331 = vld [vmem:[#allocation7 + $0x210] sm:$0xff]
    %v332 = vld [vmem:[#allocation7 + $0x218] sm:$0xff]
    %v333 = vld [vmem:[#allocation7 + $0x220] sm:$0xff]
    %v334 = vld [vmem:[#allocation7 + $0x228] sm:$0xff]
    %v335 = vld [vmem:[#allocation7 + $0x230] sm:$0xff]
    %v336 = vld [vmem:[#allocation7 + $0x238] sm:$0xff]
    %v337 = vld [vmem:[#allocation7 + $0x240] sm:$0xff]
    %v338 = vld [vmem:[#allocation7 + $0x248] sm:$0xff]
    %v339 = vld [vmem:[#allocation7 + $0x250] sm:$0xff]
    %v340 = vld [vmem:[#allocation7 + $0x258] sm:$0xff]
    %v341 = vld [vmem:[#allocation7 + $0x260] sm:$0xff]
    %v342 = vld [vmem:[#allocation7 + $0x268] sm:$0xff]
    %v343 = vld [vmem:[#allocation7 + $0x270] sm:$0xff]
    %v344 = vld [vmem:[#allocation7 + $0x278] sm:$0xff]
    %v345 = vld [vmem:[#allocation7 + $0x280] sm:$0xff]
    %v346 = vld [vmem:[#allocation7 + $0x288] sm:$0xff]
    %v347 = vld [vmem:[#allocation7 + $0x290] sm:$0xff]
    %v348 = vld [vmem:[#allocation7 + $0x298] sm:$0xff]
    %v349 = vld [vmem:[#allocation7 + $0x2a0] sm:$0xff]
    %v350 = vld [vmem:[#allocation7 + $0x2a8] sm:$0xff]
    %v351 = vld [vmem:[#allocation7 + $0x2b0] sm:$0xff]
    %v352 = vld [vmem:[#allocation7 + $0x2b8] sm:$0xff]
    %v353 = vld [vmem:[#allocation7 + $0x2c0] sm:$0xff]
    %v354 = vld [vmem:[#allocation7 + $0x2c8] sm:$0xff]
    %v355 = vld [vmem:[#allocation7 + $0x2d0] sm:$0xff]
    %v356 = vld [vmem:[#allocation7 + $0x2d8] sm:$0xff]
    %v357 = vld [vmem:[#allocation7 + $0x2e0] sm:$0xff]
    %v358 = vld [vmem:[#allocation7 + $0x2e8] sm:$0xff]
    %v359 = vld [vmem:[#allocation7 + $0x2f0] sm:$0xff]
    %v360 = vld [vmem:[#allocation7 + $0x2f8] sm:$0xff]
    %v361 = vld [vmem:[#allocation7 + $0x300] sm:$0xff]
    %v362 = vld [vmem:[#allocation7 + $0x308] sm:$0xff]
    %v363 = vld [vmem:[#allocation7 + $0x310] sm:$0xff]
    %v364 = vld [vmem:[#allocation7 + $0x318] sm:$0xff]
    %v365 = vld [vmem:[#allocation7 + $0x320] sm:$0xff]
    %v366 = vld [vmem:[#allocation7 + $0x328] sm:$0xff]
    %v367 = vld [vmem:[#allocation7 + $0x330] sm:$0xff]
    %v368 = vld [vmem:[#allocation7 + $0x338] sm:$0xff]
    %v369 = vld [vmem:[#allocation7 + $0x340] sm:$0xff]
    %v370 = vld [vmem:[#allocation7 + $0x348] sm:$0xff]
    %v371 = vld [vmem:[#allocation7 + $0x350] sm:$0xff]
    %v372 = vld [vmem:[#allocation7 + $0x358] sm:$0xff]
    %v373 = vld [vmem:[#allocation7 + $0x360] sm:$0xff]
    %v374 = vld [vmem:[#allocation7 + $0x368] sm:$0xff]
    %v375 = vld [vmem:[#allocation7 + $0x370] sm:$0xff]
    %v376 = vld [vmem:[#allocation7 + $0x378] sm:$0xff]
    %v377 = vld [vmem:[#allocation7 + $0x380] sm:$0xff]
    %v378 = vld [vmem:[#allocation7 + $0x388] sm:$0xff]
    %v379 = vld [vmem:[#allocation7 + $0x390] sm:$0xff]
    %v380 = vld [vmem:[#allocation7 + $0x398] sm:$0xff]
    %v381 = vld [vmem:[#allocation7 + $0x3a0] sm:$0xff]
    %v382 = vld [vmem:[#allocation7 + $0x3a8] sm:$0xff]
    %v383 = vld [vmem:[#allocation7 + $0x3b0] sm:$0xff]
    %v384 = vld [vmem:[#allocation7 + $0x3b8] sm:$0xff]
    %v385 = vld [vmem:[#allocation7 + $0x3c0] sm:$0xff]
    %v386 = vld [vmem:[#allocation7 + $0x3c8] sm:$0xff]
    %v387 = vld [vmem:[#allocation7 + $0x3d0] sm:$0xff]
    %v388 = vld [vmem:[#allocation7 + $0x3d8] sm:$0xff]
    %v389 = vld [vmem:[#allocation7 + $0x3e0] sm:$0xff]
    %v390 = vld [vmem:[#allocation7 + $0x3e8] sm:$0xff]
    %v391 = vld [vmem:[#allocation7 + $0x3f0] sm:$0xff]
    %v392 = vld [vmem:[#allocation7 + $0x3f8] sm:$0xff]
    %v393 = vld [vmem:[%s4] sm:$0xf]
    %v395 = vlaneseq
    %v396 = vshrl.u32 %v395, 7
    %v397 = vsub.s32 0, %v396
    %v398 = vrot.slane %v393, %v397
    %v399 = vlaneseq
    %v400 = vshrl.u32 %v399, 7
    %v401 = vsub.s32 1, %v400
    %v402 = vrot.slane %v393, %v401
    %v403 = vlaneseq
    %v404 = vshrl.u32 %v403, 7
    %v405 = vsub.s32 2, %v404
    %v406 = vrot.slane %v393, %v405
    %v407 = vlaneseq
    %v408 = vshrl.u32 %v407, 7
    %v409 = vsub.s32 3, %v408
    %v410 = vrot.slane %v393, %v409
    %v543 = vunpack.c.l.b16 %v265
    %v544 = vunpack.c.h.b16 %v265
    %v545 = vunpack.c.l.b16 %v266
    %v546 = vunpack.c.h.b16 %v266
    %v547 = vunpack.c.l.b16 %v267
    %v548 = vunpack.c.h.b16 %v267
    %v549 = vunpack.c.l.b16 %v268
    %v550 = vunpack.c.h.b16 %v268
    %v551 = vunpack.c.l.b16 %v269
    %v552 = vunpack.c.h.b16 %v269
    %v553 = vunpack.c.l.b16 %v270
    %v554 = vunpack.c.h.b16 %v270
    %v555 = vunpack.c.l.b16 %v271
    %v556 = vunpack.c.h.b16 %v271
    %v557 = vunpack.c.l.b16 %v272
    %v558 = vunpack.c.h.b16 %v272
    %v559 = vunpack.c.l.b16 %v273
    %v560 = vunpack.c.h.b16 %v273
    %v561 = vunpack.c.l.b16 %v274
    %v562 = vunpack.c.h.b16 %v274
    %v563 = vunpack.c.l.b16 %v275
    %v564 = vunpack.c.h.b16 %v275
    %v565 = vunpack.c.l.b16 %v276
    %v566 = vunpack.c.h.b16 %v276
    %v567 = vunpack.c.l.b16 %v277
    %v568 = vunpack.c.h.b16 %v277
    %v569 = vunpack.c.l.b16 %v278
    %v570 = vunpack.c.h.b16 %v278
    %v571 = vunpack.c.l.b16 %v279
    %v572 = vunpack.c.h.b16 %v279
    %v573 = vunpack.c.l.b16 %v280
    %v574 = vunpack.c.h.b16 %v280
    %v575 = vunpack.c.l.b16 %v281
    %v576 = vunpack.c.h.b16 %v281
    %v577 = vunpack.c.l.b16 %v282
    %v578 = vunpack.c.h.b16 %v282
    %v579 = vunpack.c.l.b16 %v283
    %v580 = vunpack.c.h.b16 %v283
    %v581 = vunpack.c.l.b16 %v284
    %v582 = vunpack.c.h.b16 %v284
    %v583 = vunpack.c.l.b16 %v285
    %v584 = vunpack.c.h.b16 %v285
    %v585 = vunpack.c.l.b16 %v286
    %v586 = vunpack.c.h.b16 %v286
    %v587 = vunpack.c.l.b16 %v287
    %v588 = vunpack.c.h.b16 %v287
    %v589 = vunpack.c.l.b16 %v288
    %v590 = vunpack.c.h.b16 %v288
    %v591 = vunpack.c.l.b16 %v289
    %v592 = vunpack.c.h.b16 %v289
    %v593 = vunpack.c.l.b16 %v290
    %v594 = vunpack.c.h.b16 %v290
    %v595 = vunpack.c.l.b16 %v291
    %v596 = vunpack.c.h.b16 %v291
    %v597 = vunpack.c.l.b16 %v292
    %v598 = vunpack.c.h.b16 %v292
    %v599 = vunpack.c.l.b16 %v293
    %v600 = vunpack.c.h.b16 %v293
    %v601 = vunpack.c.l.b16 %v294
    %v602 = vunpack.c.h.b16 %v294
    %v603 = vunpack.c.l.b16 %v295
    %v604 = vunpack.c.h.b16 %v295
    %v605 = vunpack.c.l.b16 %v296
    %v606 = vunpack.c.h.b16 %v296
    %v607 = vunpack.c.l.b16 %v297
    %v608 = vunpack.c.h.b16 %v297
    %v609 = vunpack.c.l.b16 %v298
    %v610 = vunpack.c.h.b16 %v298
    %v611 = vunpack.c.l.b16 %v299
    %v612 = vunpack.c.h.b16 %v299
    %v613 = vunpack.c.l.b16 %v300
    %v614 = vunpack.c.h.b16 %v300
    %v615 = vunpack.c.l.b16 %v301
    %v616 = vunpack.c.h.b16 %v301
    %v617 = vunpack.c.l.b16 %v302
    %v618 = vunpack.c.h.b16 %v302
    %v619 = vunpack.c.l.b16 %v303
    %v620 = vunpack.c.h.b16 %v303
    %v621 = vunpack.c.l.b16 %v304
    %v622 = vunpack.c.h.b16 %v304
    %v623 = vunpack.c.l.b16 %v305
    %v624 = vunpack.c.h.b16 %v305
    %v625 = vunpack.c.l.b16 %v306
    %v626 = vunpack.c.h.b16 %v306
    %v627 = vunpack.c.l.b16 %v307
    %v628 = vunpack.c.h.b16 %v307
    %v629 = vunpack.c.l.b16 %v308
    %v630 = vunpack.c.h.b16 %v308
    %v631 = vunpack.c.l.b16 %v309
    %v632 = vunpack.c.h.b16 %v309
    %v633 = vunpack.c.l.b16 %v310
    %v634 = vunpack.c.h.b16 %v310
    %v635 = vunpack.c.l.b16 %v311
    %v636 = vunpack.c.h.b16 %v311
    %v637 = vunpack.c.l.b16 %v312
    %v638 = vunpack.c.h.b16 %v312
    %v639 = vunpack.c.l.b16 %v313
    %v640 = vunpack.c.h.b16 %v313
    %v641 = vunpack.c.l.b16 %v314
    %v642 = vunpack.c.h.b16 %v314
    %v643 = vunpack.c.l.b16 %v315
    %v644 = vunpack.c.h.b16 %v315
    %v645 = vunpack.c.l.b16 %v316
    %v646 = vunpack.c.h.b16 %v316
    %v647 = vunpack.c.l.b16 %v317
    %v648 = vunpack.c.h.b16 %v317
    %v649 = vunpack.c.l.b16 %v318
    %v650 = vunpack.c.h.b16 %v318
    %v651 = vunpack.c.l.b16 %v319
    %v652 = vunpack.c.h.b16 %v319
    %v653 = vunpack.c.l.b16 %v320
    %v654 = vunpack.c.h.b16 %v320
    %v655 = vunpack.c.l.b16 %v321
    %v656 = vunpack.c.h.b16 %v321
    %v657 = vunpack.c.l.b16 %v322
    %v658 = vunpack.c.h.b16 %v322
    %v659 = vunpack.c.l.b16 %v323
    %v660 = vunpack.c.h.b16 %v323
    %v661 = vunpack.c.l.b16 %v324
    %v662 = vunpack.c.h.b16 %v324
    %v663 = vunpack.c.l.b16 %v325
    %v664 = vunpack.c.h.b16 %v325
    %v665 = vunpack.c.l.b16 %v326
    %v666 = vunpack.c.h.b16 %v326
    %v667 = vunpack.c.l.b16 %v327
    %v668 = vunpack.c.h.b16 %v327
    %v669 = vunpack.c.l.b16 %v328
    %v670 = vunpack.c.h.b16 %v328
    %v671 = vunpack.c.l.b16 %v329
    %v672 = vunpack.c.h.b16 %v329
    %v673 = vunpack.c.l.b16 %v330
    %v674 = vunpack.c.h.b16 %v330
    %v675 = vunpack.c.l.b16 %v331
    %v676 = vunpack.c.h.b16 %v331
    %v677 = vunpack.c.l.b16 %v332
    %v678 = vunpack.c.h.b16 %v332
    %v679 = vunpack.c.l.b16 %v333
    %v680 = vunpack.c.h.b16 %v333
    %v681 = vunpack.c.l.b16 %v334
    %v682 = vunpack.c.h.b16 %v334
    %v683 = vunpack.c.l.b16 %v335
    %v684 = vunpack.c.h.b16 %v335
    %v685 = vunpack.c.l.b16 %v336
    %v686 = vunpack.c.h.b16 %v336
    %v687 = vunpack.c.l.b16 %v337
    %v688 = vunpack.c.h.b16 %v337
    %v689 = vunpack.c.l.b16 %v338
    %v690 = vunpack.c.h.b16 %v338
    %v691 = vunpack.c.l.b16 %v339
    %v692 = vunpack.c.h.b16 %v339
    %v693 = vunpack.c.l.b16 %v340
    %v694 = vunpack.c.h.b16 %v340
    %v695 = vunpack.c.l.b16 %v341
    %v696 = vunpack.c.h.b16 %v341
    %v697 = vunpack.c.l.b16 %v342
    %v698 = vunpack.c.h.b16 %v342
    %v699 = vunpack.c.l.b16 %v343
    %v700 = vunpack.c.h.b16 %v343
    %v701 = vunpack.c.l.b16 %v344
    %v702 = vunpack.c.h.b16 %v344
    %v703 = vunpack.c.l.b16 %v345
    %v704 = vunpack.c.h.b16 %v345
    %v705 = vunpack.c.l.b16 %v346
    %v706 = vunpack.c.h.b16 %v346
    %v707 = vunpack.c.l.b16 %v347
    %v708 = vunpack.c.h.b16 %v347
    %v709 = vunpack.c.l.b16 %v348
    %v710 = vunpack.c.h.b16 %v348
    %v711 = vunpack.c.l.b16 %v349
    %v712 = vunpack.c.h.b16 %v349
    %v713 = vunpack.c.l.b16 %v350
    %v714 = vunpack.c.h.b16 %v350
    %v715 = vunpack.c.l.b16 %v351
    %v716 = vunpack.c.h.b16 %v351
    %v717 = vunpack.c.l.b16 %v352
    %v718 = vunpack.c.h.b16 %v352
    %v719 = vunpack.c.l.b16 %v353
    %v720 = vunpack.c.h.b16 %v353
    %v721 = vunpack.c.l.b16 %v354
    %v722 = vunpack.c.h.b16 %v354
    %v723 = vunpack.c.l.b16 %v355
    %v724 = vunpack.c.h.b16 %v355
    %v725 = vunpack.c.l.b16 %v356
    %v726 = vunpack.c.h.b16 %v356
    %v727 = vunpack.c.l.b16 %v357
    %v728 = vunpack.c.h.b16 %v357
    %v729 = vunpack.c.l.b16 %v358
    %v730 = vunpack.c.h.b16 %v358
    %v731 = vunpack.c.l.b16 %v359
    %v732 = vunpack.c.h.b16 %v359
    %v733 = vunpack.c.l.b16 %v360
    %v734 = vunpack.c.h.b16 %v360
    %v735 = vunpack.c.l.b16 %v361
    %v736 = vunpack.c.h.b16 %v361
    %v737 = vunpack.c.l.b16 %v362
    %v738 = vunpack.c.h.b16 %v362
    %v739 = vunpack.c.l.b16 %v363
    %v740 = vunpack.c.h.b16 %v363
    %v741 = vunpack.c.l.b16 %v364
    %v742 = vunpack.c.h.b16 %v364
    %v743 = vunpack.c.l.b16 %v365
    %v744 = vunpack.c.h.b16 %v365
    %v745 = vunpack.c.l.b16 %v366
    %v746 = vunpack.c.h.b16 %v366
    %v747 = vunpack.c.l.b16 %v367
    %v748 = vunpack.c.h.b16 %v367
    %v749 = vunpack.c.l.b16 %v368
    %v750 = vunpack.c.h.b16 %v368
    %v751 = vunpack.c.l.b16 %v369
    %v752 = vunpack.c.h.b16 %v369
    %v753 = vunpack.c.l.b16 %v370
    %v754 = vunpack.c.h.b16 %v370
    %v755 = vunpack.c.l.b16 %v371
    %v756 = vunpack.c.h.b16 %v371
    %v757 = vunpack.c.l.b16 %v372
    %v758 = vunpack.c.h.b16 %v372
    %v759 = vunpack.c.l.b16 %v373
    %v760 = vunpack.c.h.b16 %v373
    %v761 = vunpack.c.l.b16 %v374
    %v762 = vunpack.c.h.b16 %v374
    %v763 = vunpack.c.l.b16 %v375
    %v764 = vunpack.c.h.b16 %v375
    %v765 = vunpack.c.l.b16 %v376
    %v766 = vunpack.c.h.b16 %v376
    %v767 = vunpack.c.l.b16 %v377
    %v768 = vunpack.c.h.b16 %v377
    %v769 = vunpack.c.l.b16 %v378
    %v770 = vunpack.c.h.b16 %v378
    %v771 = vunpack.c.l.b16 %v379
    %v772 = vunpack.c.h.b16 %v379
    %v773 = vunpack.c.l.b16 %v380
    %v774 = vunpack.c.h.b16 %v380
    %v775 = vunpack.c.l.b16 %v381
    %v776 = vunpack.c.h.b16 %v381
    %v777 = vunpack.c.l.b16 %v382
    %v778 = vunpack.c.h.b16 %v382
    %v779 = vunpack.c.l.b16 %v383
    %v780 = vunpack.c.h.b16 %v383
    %v781 = vunpack.c.l.b16 %v384
    %v782 = vunpack.c.h.b16 %v384
    %v783 = vunpack.c.l.b16 %v385
    %v784 = vunpack.c.h.b16 %v385
    %v785 = vunpack.c.l.b16 %v386
    %v786 = vunpack.c.h.b16 %v386
    %v787 = vunpack.c.l.b16 %v387
    %v788 = vunpack.c.h.b16 %v387
    %v789 = vunpack.c.l.b16 %v388
    %v790 = vunpack.c.h.b16 %v388
    %v791 = vunpack.c.l.b16 %v389
    %v792 = vunpack.c.h.b16 %v389
    %v793 = vunpack.c.l.b16 %v390
    %v794 = vunpack.c.h.b16 %v390
    %v795 = vunpack.c.l.b16 %v391
    %v796 = vunpack.c.h.b16 %v391
    %v797 = vunpack.c.l.b16 %v392
    %v798 = vunpack.c.h.b16 %v392
    %v799 = vpack.c.b16 %v547, %v543
    %v800 = vpack.c.b16 %v548, %v544
    %v801 = vpack.c.b16 %v549, %v545
    %v802 = vpack.c.b16 %v550, %v546
    %v803 = vpack.c.b16 %v555, %v551
    %v804 = vpack.c.b16 %v556, %v552
    %v805 = vpack.c.b16 %v557, %v553
    %v806 = vpack.c.b16 %v558, %v554
    %v807 = vpack.c.b16 %v563, %v559
    %v808 = vpack.c.b16 %v564, %v560
    %v809 = vpack.c.b16 %v565, %v561
    %v810 = vpack.c.b16 %v566, %v562
    %v811 = vpack.c.b16 %v571, %v567
    %v812 = vpack.c.b16 %v572, %v568
    %v813 = vpack.c.b16 %v573, %v569
    %v814 = vpack.c.b16 %v574, %v570
    %v815 = vpack.c.b16 %v579, %v575
    %v816 = vpack.c.b16 %v580, %v576
    %v817 = vpack.c.b16 %v581, %v577
    %v818 = vpack.c.b16 %v582, %v578
    %v819 = vpack.c.b16 %v587, %v583
    %v820 = vpack.c.b16 %v588, %v584
    %v821 = vpack.c.b16 %v589, %v585
    %v822 = vpack.c.b16 %v590, %v586
    %v823 = vpack.c.b16 %v595, %v591
    %v824 = vpack.c.b16 %v596, %v592
    %v825 = vpack.c.b16 %v597, %v593
    %v826 = vpack.c.b16 %v598, %v594
    %v827 = vpack.c.b16 %v603, %v599
    %v828 = vpack.c.b16 %v604, %v600
    %v829 = vpack.c.b16 %v605, %v601
    %v830 = vpack.c.b16 %v606, %v602
    %v831 = vpack.c.b16 %v611, %v607
    %v832 = vpack.c.b16 %v612, %v608
    %v833 = vpack.c.b16 %v613, %v609
    %v834 = vpack.c.b16 %v614, %v610
    %v835 = vpack.c.b16 %v619, %v615
    %v836 = vpack.c.b16 %v620, %v616
    %v837 = vpack.c.b16 %v621, %v617
    %v838 = vpack.c.b16 %v622, %v618
    %v839 = vpack.c.b16 %v627, %v623
    %v840 = vpack.c.b16 %v628, %v624
    %v841 = vpack.c.b16 %v629, %v625
    %v842 = vpack.c.b16 %v630, %v626
    %v843 = vpack.c.b16 %v635, %v631
    %v844 = vpack.c.b16 %v636, %v632
    %v845 = vpack.c.b16 %v637, %v633
    %v846 = vpack.c.b16 %v638, %v634
    %v847 = vpack.c.b16 %v643, %v639
    %v848 = vpack.c.b16 %v644, %v640
    %v849 = vpack.c.b16 %v645, %v641
    %v850 = vpack.c.b16 %v646, %v642
    %v851 = vpack.c.b16 %v651, %v647
    %v852 = vpack.c.b16 %v652, %v648
    %v853 = vpack.c.b16 %v653, %v649
    %v854 = vpack.c.b16 %v654, %v650
    %v855 = vpack.c.b16 %v659, %v655
    %v856 = vpack.c.b16 %v660, %v656
    %v857 = vpack.c.b16 %v661, %v657
    %v858 = vpack.c.b16 %v662, %v658
    %v859 = vpack.c.b16 %v667, %v663
    %v860 = vpack.c.b16 %v668, %v664
    %v861 = vpack.c.b16 %v669, %v665
    %v862 = vpack.c.b16 %v670, %v666
    %v863 = vpack.c.b16 %v675, %v671
    %v864 = vpack.c.b16 %v676, %v672
    %v865 = vpack.c.b16 %v677, %v673
    %v866 = vpack.c.b16 %v678, %v674
    %v867 = vpack.c.b16 %v683, %v679
    %v868 = vpack.c.b16 %v684, %v680
    %v869 = vpack.c.b16 %v685, %v681
    %v870 = vpack.c.b16 %v686, %v682
    %v871 = vpack.c.b16 %v691, %v687
    %v872 = vpack.c.b16 %v692, %v688
    %v873 = vpack.c.b16 %v693, %v689
    %v874 = vpack.c.b16 %v694, %v690
    %v875 = vpack.c.b16 %v699, %v695
    %v876 = vpack.c.b16 %v700, %v696
    %v877 = vpack.c.b16 %v701, %v697
    %v878 = vpack.c.b16 %v702, %v698
    %v879 = vpack.c.b16 %v707, %v703
    %v880 = vpack.c.b16 %v708, %v704
    %v881 = vpack.c.b16 %v709, %v705
    %v882 = vpack.c.b16 %v710, %v706
    %v883 = vpack.c.b16 %v715, %v711
    %v884 = vpack.c.b16 %v716, %v712
    %v885 = vpack.c.b16 %v717, %v713
    %v886 = vpack.c.b16 %v718, %v714
    %v887 = vpack.c.b16 %v723, %v719
    %v888 = vpack.c.b16 %v724, %v720
    %v889 = vpack.c.b16 %v725, %v721
    %v890 = vpack.c.b16 %v726, %v722
    %v891 = vpack.c.b16 %v731, %v727
    %v892 = vpack.c.b16 %v732, %v728
    %v893 = vpack.c.b16 %v733, %v729
    %v894 = vpack.c.b16 %v734, %v730
    %v895 = vpack.c.b16 %v739, %v735
    %v896 = vpack.c.b16 %v740, %v736
    %v897 = vpack.c.b16 %v741, %v737
    %v898 = vpack.c.b16 %v742, %v738
    %v899 = vpack.c.b16 %v747, %v743
    %v900 = vpack.c.b16 %v748, %v744
    %v901 = vpack.c.b16 %v749, %v745
    %v902 = vpack.c.b16 %v750, %v746
    %v903 = vpack.c.b16 %v755, %v751
    %v904 = vpack.c.b16 %v756, %v752
    %v905 = vpack.c.b16 %v757, %v753
    %v906 = vpack.c.b16 %v758, %v754
    %v907 = vpack.c.b16 %v763, %v759
    %v908 = vpack.c.b16 %v764, %v760
    %v909 = vpack.c.b16 %v765, %v761
    %v910 = vpack.c.b16 %v766, %v762
    %v911 = vpack.c.b16 %v771, %v767
    %v912 = vpack.c.b16 %v772, %v768
    %v913 = vpack.c.b16 %v773, %v769
    %v914 = vpack.c.b16 %v774, %v770
    %v915 = vpack.c.b16 %v779, %v775
    %v916 = vpack.c.b16 %v780, %v776
    %v917 = vpack.c.b16 %v781, %v777
    %v918 = vpack.c.b16 %v782, %v778
    %v919 = vpack.c.b16 %v787, %v783
    %v920 = vpack.c.b16 %v788, %v784
    %v921 = vpack.c.b16 %v789, %v785
    %v922 = vpack.c.b16 %v790, %v786
    %v923 = vpack.c.b16 %v795, %v791
    %v924 = vpack.c.b16 %v796, %v792
    %v925 = vpack.c.b16 %v797, %v793
    %v926 = vpack.c.b16 %v798, %v794
    %1055 = vmatprep.subr.bf16.mxu0 %v800
    %1056 = vmatpush1.bf16.msra.mxu0 %v799
    %1057 = vmatprep.subr.bf16.mxu0 %v804
    %1058 = vmatpush1.bf16.msra.mxu0 %v803
    %1059 = vmatprep.subr.bf16.mxu0 %v808
    %1060 = vmatpush1.bf16.msra.mxu0 %v807
    %1061 = vmatprep.subr.bf16.mxu0 %v812
    %1062 = vmatpush1.bf16.msra.mxu0 %v811
    %1063 = vmatprep.subr.bf16.mxu0 %v816
    %1064 = vmatpush1.bf16.msra.mxu0 %v815
    %1065 = vmatprep.subr.bf16.mxu0 %v820
    %1066 = vmatpush1.bf16.msra.mxu0 %v819
    %1067 = vmatprep.subr.bf16.mxu0 %v824
    %1068 = vmatpush1.bf16.msra.mxu0 %v823
    %1069 = vmatprep.subr.bf16.mxu0 %v828
    %1070 = vmatpush1.bf16.msra.mxu0 %v827
    %1071 = vmatprep.subr.bf16.mxu0 %v832
    %1072 = vmatpush1.bf16.msra.mxu0 %v831
    %1073 = vmatprep.subr.bf16.mxu0 %v836
    %1074 = vmatpush1.bf16.msra.mxu0 %v835
    %1075 = vmatprep.subr.bf16.mxu0 %v840
    %1076 = vmatpush1.bf16.msra.mxu0 %v839
    %1077 = vmatprep.subr.bf16.mxu0 %v844
    %1078 = vmatpush1.bf16.msra.mxu0 %v843
    %1079 = vmatprep.subr.bf16.mxu0 %v848
    %1080 = vmatpush1.bf16.msra.mxu0 %v847
    %1081 = vmatprep.subr.bf16.mxu0 %v852
    %1082 = vmatpush1.bf16.msra.mxu0 %v851
    %1083 = vmatprep.subr.bf16.mxu0 %v856
    %1084 = vmatpush1.bf16.msra.mxu0 %v855
    %1085 = vmatprep.subr.bf16.mxu0 %v860
    %1086 = vmatpush1.bf16.msra.mxu0 %v859
    %1087 = vmatprep.mubr.bf16.mxu0 %v262
    %1088 = vmatmul.mubr.bf16.gmra.mrb[0].mxu0 %v261
    %v1089 = vpop.f32.mrb[0].mxu0
    %v1090 = vadd.f32 %v398, %v1089
    %v1091 = vpop.f32.mrb[0].mxu0
    %v1092 = vadd.f32 %v402, %v1091
    %v1093 = vpop.f32.mrb[0].mxu0
    %v1094 = vadd.f32 %v398, %v1093
    %v1095 = vpop.f32.mrb[0].mxu0
    %v1096 = vadd.f32 %v402, %v1095
    %1097 = vdwg.mxu0
    %1098 = vmatprep.subr.bf16.mxu0 %v864
    %1099 = vmatpush1.bf16.msra.mxu0 %v863
    %1100 = vmatprep.subr.bf16.mxu0 %v868
    %1101 = vmatpush1.bf16.msra.mxu0 %v867
    %1102 = vmatprep.subr.bf16.mxu0 %v872
    %1103 = vmatpush1.bf16.msra.mxu0 %v871
    %1104 = vmatprep.subr.bf16.mxu0 %v876
    %1105 = vmatpush1.bf16.msra.mxu0 %v875
    %1106 = vmatprep.subr.bf16.mxu0 %v880
    %1107 = vmatpush1.bf16.msra.mxu0 %v879
    %1108 = vmatprep.subr.bf16.mxu0 %v884
    %1109 = vmatpush1.bf16.msra.mxu0 %v883
    %1110 = vmatprep.subr.bf16.mxu0 %v888
    %1111 = vmatpush1.bf16.msra.mxu0 %v887
    %1112 = vmatprep.subr.bf16.mxu0 %v892
    %1113 = vmatpush1.bf16.msra.mxu0 %v891
    %1114 = vmatprep.subr.bf16.mxu0 %v896
    %1115 = vmatpush1.bf16.msra.mxu0 %v895
    %1116 = vmatprep.subr.bf16.mxu0 %v900
    %1117 = vmatpush1.bf16.msra.mxu0 %v899
    %1118 = vmatprep.subr.bf16.mxu0 %v904
    %1119 = vmatpush1.bf16.msra.mxu0 %v903
    %1120 = vmatprep.subr.bf16.mxu0 %v908
    %1121 = vmatpush1.bf16.msra.mxu0 %v907
    %1122 = vmatprep.subr.bf16.mxu0 %v912
    %1123 = vmatpush1.bf16.msra.mxu0 %v911
    %1124 = vmatprep.subr.bf16.mxu0 %v916
    %1125 = vmatpush1.bf16.msra.mxu0 %v915
    %1126 = vmatprep.subr.bf16.mxu0 %v920
    %1127 = vmatpush1.bf16.msra.mxu0 %v919
    %1128 = vmatprep.subr.bf16.mxu0 %v924
    %1129 = vmatpush1.bf16.msra.mxu0 %v923
    %1130 = vmatprep.mubr.bf16.mxu0 %v264
    %1131 = vmatmul.mubr.bf16.gmra.mrb[0].mxu0 %v263
    %v1132 = vpop.f32.mrb[0].mxu0
    %v1133 = vadd.f32 %v1090, %v1132
    %v1134 = vpop.f32.mrb[0].mxu0
    %v1135 = vadd.f32 %v1092, %v1134
    %v1136 = vpop.f32.mrb[0].mxu0
    %v1137 = vadd.f32 %v1094, %v1136
    %v1138 = vpop.f32.mrb[0].mxu0
    %v1139 = vadd.f32 %v1096, %v1138
    %1140 = vdwg.mxu0
    %1141 = vmatprep.subr.bf16.mxu0 %v802
    %1142 = vmatpush1.bf16.msra.mxu0 %v801
    %1143 = vmatprep.subr.bf16.mxu0 %v806
    %1144 = vmatpush1.bf16.msra.mxu0 %v805
    %1145 = vmatprep.subr.bf16.mxu0 %v810
    %1146 = vmatpush1.bf16.msra.mxu0 %v809
    %1147 = vmatprep.subr.bf16.mxu0 %v814
    %1148 = vmatpush1.bf16.msra.mxu0 %v813
    %1149 = vmatprep.subr.bf16.mxu0 %v818
    %1150 = vmatpush1.bf16.msra.mxu0 %v817
    %1151 = vmatprep.subr.bf16.mxu0 %v822
    %1152 = vmatpush1.bf16.msra.mxu0 %v821
    %1153 = vmatprep.subr.bf16.mxu0 %v826
    %1154 = vmatpush1.bf16.msra.mxu0 %v825
    %1155 = vmatprep.subr.bf16.mxu0 %v830
    %1156 = vmatpush1.bf16.msra.mxu0 %v829
    %1157 = vmatprep.subr.bf16.mxu0 %v834
    %1158 = vmatpush1.bf16.msra.mxu0 %v833
    %1159 = vmatprep.subr.bf16.mxu0 %v838
    %1160 = vmatpush1.bf16.msra.mxu0 %v837
    %1161 = vmatprep.subr.bf16.mxu0 %v842
    %1162 = vmatpush1.bf16.msra.mxu0 %v841
    %1163 = vmatprep.subr.bf16.mxu0 %v846
    %1164 = vmatpush1.bf16.msra.mxu0 %v845
    %1165 = vmatprep.subr.bf16.mxu0 %v850
    %1166 = vmatpush1.bf16.msra.mxu0 %v849
    %1167 = vmatprep.subr.bf16.mxu0 %v854
    %1168 = vmatpush1.bf16.msra.mxu0 %v853
    %1169 = vmatprep.subr.bf16.mxu0 %v858
    %1170 = vmatpush1.bf16.msra.mxu0 %v857
    %1171 = vmatprep.subr.bf16.mxu0 %v862
    %1172 = vmatpush1.bf16.msra.mxu0 %v861
    %1173 = vmatprep.mubr.bf16.mxu0 %v262
    %1174 = vmatmul.mubr.bf16.gmra.mrb[0].mxu0 %v261
    %v1175 = vpop.f32.mrb[0].mxu0
    %v1176 = vadd.f32 %v406, %v1175
    %v1177 = vpop.f32.mrb[0].mxu0
    %v1178 = vadd.f32 %v410, %v1177
    %v1179 = vpop.f32.mrb[0].mxu0
    %v1180 = vadd.f32 %v406, %v1179
    %v1181 = vpop.f32.mrb[0].mxu0
    %v1182 = vadd.f32 %v410, %v1181
    %1183 = vdwg.mxu0
    %1184 = vmatprep.subr.bf16.mxu0 %v866
    %1185 = vmatpush1.bf16.msra.mxu0 %v865
    %1186 = vmatprep.subr.bf16.mxu0 %v870
    %1187 = vmatpush1.bf16.msra.mxu0 %v869
    %1188 = vmatprep.subr.bf16.mxu0 %v874
    %1189 = vmatpush1.bf16.msra.mxu0 %v873
    %1190 = vmatprep.subr.bf16.mxu0 %v878
    %1191 = vmatpush1.bf16.msra.mxu0 %v877
    %1192 = vmatprep.subr.bf16.mxu0 %v882
    %1193 = vmatpush1.bf16.msra.mxu0 %v881
    %1194 = vmatprep.subr.bf16.mxu0 %v886
    %1195 = vmatpush1.bf16.msra.mxu0 %v885
    %1196 = vmatprep.subr.bf16.mxu0 %v890
    %1197 = vmatpush1.bf16.msra.mxu0 %v889
    %1198 = vmatprep.subr.bf16.mxu0 %v894
    %1199 = vmatpush1.bf16.msra.mxu0 %v893
    %1200 = vmatprep.subr.bf16.mxu0 %v898
    %1201 = vmatpush1.bf16.msra.mxu0 %v897
    %1202 = vmatprep.subr.bf16.mxu0 %v902
    %1203 = vmatpush1.bf16.msra.mxu0 %v901
    %1204 = vmatprep.subr.bf16.mxu0 %v906
    %1205 = vmatpush1.bf16.msra.mxu0 %v905
    %1206 = vmatprep.subr.bf16.mxu0 %v910
    %1207 = vmatpush1.bf16.msra.mxu0 %v909
    %1208 = vmatprep.subr.bf16.mxu0 %v914
    %1209 = vmatpush1.bf16.msra.mxu0 %v913
    %1210 = vmatprep.subr.bf16.mxu0 %v918
    %1211 = vmatpush1.bf16.msra.mxu0 %v917
    %1212 = vmatprep.subr.bf16.mxu0 %v922
    %1213 = vmatpush1.bf16.msra.mxu0 %v921
    %1214 = vmatprep.subr.bf16.mxu0 %v926
    %1215 = vmatpush1.bf16.msra.mxu0 %v925
    %1216 = vmatprep.mubr.bf16.mxu0 %v264
    %1217 = vmatmul.mubr.bf16.gmra.mrb[0].mxu0 %v263
    %v1218 = vpop.f32.mrb[0].mxu0
    %v1219 = vadd.f32 %v1176, %v1218
    %v1220 = vpop.f32.mrb[0].mxu0
    %v1221 = vadd.f32 %v1178, %v1220
    %v1222 = vpop.f32.mrb[0].mxu0
    %v1223 = vadd.f32 %v1180, %v1222
    %v1224 = vpop.f32.mrb[0].mxu0
    %v1225 = vadd.f32 %v1182, %v1224
    %1226 = vdwg.mxu0
    %v1227 = vmul.f32 %v1133, 0.01
    %v1228 = vmul.f32 %v1135, 0.01
    %v1229 = vmul.f32 %v1219, 0.01
    %v1230 = vmul.f32 %v1221, 0.01
    %v1231 = vmul.f32 %v1137, 0.01
    %v1232 = vmul.f32 %v1139, 0.01
    %v1233 = vmul.f32 %v1223, 0.01
    %v1234 = vmul.f32 %v1225, 0.01
    %v1235 = vmax.f32 %v1133, %v1227
    %v1236 = vmax.f32 %v1135, %v1228
    %v1237 = vmax.f32 %v1219, %v1229
    %v1238 = vmax.f32 %v1221, %v1230
    %v1239 = vmax.f32 %v1137, %v1231
    %v1240 = vmax.f32 %v1139, %v1232
    %v1241 = vmax.f32 %v1223, %v1233
    %v1242 = vmax.f32 %v1225, %v1234
    %v1243 = vpack.c.bf16 %v1239, %v1235
    %v1244 = vpack.c.bf16 %v1240, %v1236
    %v1245 = vpack.c.bf16 %v1241, %v1237
    %v1246 = vpack.c.bf16 %v1242, %v1238
    %v1247 = vld [vmem:[#allocation8] sm:$0xff]
    %v1248 = vld [vmem:[#allocation8 + $0x8] sm:$0xff]
    %v1249 = vld [vmem:[#allocation8 + $0x10] sm:$0xff]
    %v1250 = vld [vmem:[#allocation8 + $0x18] sm:$0xff]
    %v1251 = vld [vmem:[#allocation8 + $0x20] sm:$0xff]
    %v1252 = vld [vmem:[#allocation8 + $0x28] sm:$0xff]
    %v1253 = vld [vmem:[#allocation8 + $0x30] sm:$0xff]
    %v1254 = vld [vmem:[#allocation8 + $0x38] sm:$0xff]
    %v1255 = vld [vmem:[#allocation8 + $0x40] sm:$0xff]
    %v1256 = vld [vmem:[#allocation8 + $0x48] sm:$0xff]
    %v1257 = vld [vmem:[#allocation8 + $0x50] sm:$0xff]
    %v1258 = vld [vmem:[#allocation8 + $0x58] sm:$0xff]
    %v1259 = vld [vmem:[#allocation8 + $0x60] sm:$0xff]
    %v1260 = vld [vmem:[#allocation8 + $0x68] sm:$0xff]
    %v1261 = vld [vmem:[#allocation8 + $0x70] sm:$0xff]
    %v1262 = vld [vmem:[#allocation8 + $0x78] sm:$0xff]
    %v1263 = vld [vmem:[#allocation8 + $0x80] sm:$0xff]
    %v1264 = vld [vmem:[#allocation8 + $0x88] sm:$0xff]
    %v1265 = vld [vmem:[#allocation8 + $0x90] sm:$0xff]
    %v1266 = vld [vmem:[#allocation8 + $0x98] sm:$0xff]
    %v1267 = vld [vmem:[#allocation8 + $0xa0] sm:$0xff]
    %v1268 = vld [vmem:[#allocation8 + $0xa8] sm:$0xff]
    %v1269 = vld [vmem:[#allocation8 + $0xb0] sm:$0xff]
    %v1270 = vld [vmem:[#allocation8 + $0xb8] sm:$0xff]
    %v1271 = vld [vmem:[#allocation8 + $0xc0] sm:$0xff]
    %v1272 = vld [vmem:[#allocation8 + $0xc8] sm:$0xff]
    %v1273 = vld [vmem:[#allocation8 + $0xd0] sm:$0xff]
    %v1274 = vld [vmem:[#allocation8 + $0xd8] sm:$0xff]
    %v1275 = vld [vmem:[#allocation8 + $0xe0] sm:$0xff]
    %v1276 = vld [vmem:[#allocation8 + $0xe8] sm:$0xff]
    %v1277 = vld [vmem:[#allocation8 + $0xf0] sm:$0xff]
    %v1278 = vld [vmem:[#allocation8 + $0xf8] sm:$0xff]
    %v1279 = vld [vmem:[#allocation8 + $0x100] sm:$0xff]
    %v1280 = vld [vmem:[#allocation8 + $0x108] sm:$0xff]
    %v1281 = vld [vmem:[#allocation8 + $0x110] sm:$0xff]
    %v1282 = vld [vmem:[#allocation8 + $0x118] sm:$0xff]
    %v1283 = vld [vmem:[#allocation8 + $0x120] sm:$0xff]
    %v1284 = vld [vmem:[#allocation8 + $0x128] sm:$0xff]
    %v1285 = vld [vmem:[#allocation8 + $0x130] sm:$0xff]
    %v1286 = vld [vmem:[#allocation8 + $0x138] sm:$0xff]
    %v1287 = vld [vmem:[#allocation8 + $0x140] sm:$0xff]
    %v1288 = vld [vmem:[#allocation8 + $0x148] sm:$0xff]
    %v1289 = vld [vmem:[#allocation8 + $0x150] sm:$0xff]
    %v1290 = vld [vmem:[#allocation8 + $0x158] sm:$0xff]
    %v1291 = vld [vmem:[#allocation8 + $0x160] sm:$0xff]
    %v1292 = vld [vmem:[#allocation8 + $0x168] sm:$0xff]
    %v1293 = vld [vmem:[#allocation8 + $0x170] sm:$0xff]
    %v1294 = vld [vmem:[#allocation8 + $0x178] sm:$0xff]
    %v1295 = vld [vmem:[#allocation8 + $0x180] sm:$0xff]
    %v1296 = vld [vmem:[#allocation8 + $0x188] sm:$0xff]
    %v1297 = vld [vmem:[#allocation8 + $0x190] sm:$0xff]
    %v1298 = vld [vmem:[#allocation8 + $0x198] sm:$0xff]
    %v1299 = vld [vmem:[#allocation8 + $0x1a0] sm:$0xff]
    %v1300 = vld [vmem:[#allocation8 + $0x1a8] sm:$0xff]
    %v1301 = vld [vmem:[#allocation8 + $0x1b0] sm:$0xff]
    %v1302 = vld [vmem:[#allocation8 + $0x1b8] sm:$0xff]
    %v1303 = vld [vmem:[#allocation8 + $0x1c0] sm:$0xff]
    %v1304 = vld [vmem:[#allocation8 + $0x1c8] sm:$0xff]
    %v1305 = vld [vmem:[#allocation8 + $0x1d0] sm:$0xff]
    %v1306 = vld [vmem:[#allocation8 + $0x1d8] sm:$0xff]
    %v1307 = vld [vmem:[#allocation8 + $0x1e0] sm:$0xff]
    %v1308 = vld [vmem:[#allocation8 + $0x1e8] sm:$0xff]
    %v1309 = vld [vmem:[#allocation8 + $0x1f0] sm:$0xff]
    %v1310 = vld [vmem:[#allocation8 + $0x1f8] sm:$0xff]
    %v1311 = vld [vmem:[#allocation8 + $0x200] sm:$0xff]
    %v1312 = vld [vmem:[#allocation8 + $0x208] sm:$0xff]
    %v1313 = vld [vmem:[#allocation8 + $0x210] sm:$0xff]
    %v1314 = vld [vmem:[#allocation8 + $0x218] sm:$0xff]
    %v1315 = vld [vmem:[#allocation8 + $0x220] sm:$0xff]
    %v1316 = vld [vmem:[#allocation8 + $0x228] sm:$0xff]
    %v1317 = vld [vmem:[#allocation8 + $0x230] sm:$0xff]
    %v1318 = vld [vmem:[#allocation8 + $0x238] sm:$0xff]
    %v1319 = vld [vmem:[#allocation8 + $0x240] sm:$0xff]
    %v1320 = vld [vmem:[#allocation8 + $0x248] sm:$0xff]
    %v1321 = vld [vmem:[#allocation8 + $0x250] sm:$0xff]
    %v1322 = vld [vmem:[#allocation8 + $0x258] sm:$0xff]
    %v1323 = vld [vmem:[#allocation8 + $0x260] sm:$0xff]
    %v1324 = vld [vmem:[#allocation8 + $0x268] sm:$0xff]
    %v1325 = vld [vmem:[#allocation8 + $0x270] sm:$0xff]
    %v1326 = vld [vmem:[#allocation8 + $0x278] sm:$0xff]
    %v1327 = vld [vmem:[#allocation8 + $0x280] sm:$0xff]
    %v1328 = vld [vmem:[#allocation8 + $0x288] sm:$0xff]
    %v1329 = vld [vmem:[#allocation8 + $0x290] sm:$0xff]
    %v1330 = vld [vmem:[#allocation8 + $0x298] sm:$0xff]
    %v1331 = vld [vmem:[#allocation8 + $0x2a0] sm:$0xff]
    %v1332 = vld [vmem:[#allocation8 + $0x2a8] sm:$0xff]
    %v1333 = vld [vmem:[#allocation8 + $0x2b0] sm:$0xff]
    %v1334 = vld [vmem:[#allocation8 + $0x2b8] sm:$0xff]
    %v1335 = vld [vmem:[#allocation8 + $0x2c0] sm:$0xff]
    %v1336 = vld [vmem:[#allocation8 + $0x2c8] sm:$0xff]
    %v1337 = vld [vmem:[#allocation8 + $0x2d0] sm:$0xff]
    %v1338 = vld [vmem:[#allocation8 + $0x2d8] sm:$0xff]
    %v1339 = vld [vmem:[#allocation8 + $0x2e0] sm:$0xff]
    %v1340 = vld [vmem:[#allocation8 + $0x2e8] sm:$0xff]
    %v1341 = vld [vmem:[#allocation8 + $0x2f0] sm:$0xff]
    %v1342 = vld [vmem:[#allocation8 + $0x2f8] sm:$0xff]
    %v1343 = vld [vmem:[#allocation8 + $0x300] sm:$0xff]
    %v1344 = vld [vmem:[#allocation8 + $0x308] sm:$0xff]
    %v1345 = vld [vmem:[#allocation8 + $0x310] sm:$0xff]
    %v1346 = vld [vmem:[#allocation8 + $0x318] sm:$0xff]
    %v1347 = vld [vmem:[#allocation8 + $0x320] sm:$0xff]
    %v1348 = vld [vmem:[#allocation8 + $0x328] sm:$0xff]
    %v1349 = vld [vmem:[#allocation8 + $0x330] sm:$0xff]
    %v1350 = vld [vmem:[#allocation8 + $0x338] sm:$0xff]
    %v1351 = vld [vmem:[#allocation8 + $0x340] sm:$0xff]
    %v1352 = vld [vmem:[#allocation8 + $0x348] sm:$0xff]
    %v1353 = vld [vmem:[#allocation8 + $0x350] sm:$0xff]
    %v1354 = vld [vmem:[#allocation8 + $0x358] sm:$0xff]
    %v1355 = vld [vmem:[#allocation8 + $0x360] sm:$0xff]
    %v1356 = vld [vmem:[#allocation8 + $0x368] sm:$0xff]
    %v1357 = vld [vmem:[#allocation8 + $0x370] sm:$0xff]
    %v1358 = vld [vmem:[#allocation8 + $0x378] sm:$0xff]
    %v1359 = vld [vmem:[#allocation8 + $0x380] sm:$0xff]
    %v1360 = vld [vmem:[#allocation8 + $0x388] sm:$0xff]
    %v1361 = vld [vmem:[#allocation8 + $0x390] sm:$0xff]
    %v1362 = vld [vmem:[#allocation8 + $0x398] sm:$0xff]
    %v1363 = vld [vmem:[#allocation8 + $0x3a0] sm:$0xff]
    %v1364 = vld [vmem:[#allocation8 + $0x3a8] sm:$0xff]
    %v1365 = vld [vmem:[#allocation8 + $0x3b0] sm:$0xff]
    %v1366 = vld [vmem:[#allocation8 + $0x3b8] sm:$0xff]
    %v1367 = vld [vmem:[#allocation8 + $0x3c0] sm:$0xff]
    %v1368 = vld [vmem:[#allocation8 + $0x3c8] sm:$0xff]
    %v1369 = vld [vmem:[#allocation8 + $0x3d0] sm:$0xff]
    %v1370 = vld [vmem:[#allocation8 + $0x3d8] sm:$0xff]
    %v1371 = vld [vmem:[#allocation8 + $0x3e0] sm:$0xff]
    %v1372 = vld [vmem:[#allocation8 + $0x3e8] sm:$0xff]
    %v1373 = vld [vmem:[#allocation8 + $0x3f0] sm:$0xff]
    %v1374 = vld [vmem:[#allocation8 + $0x3f8] sm:$0xff]
    %v1375 = vld [vmem:[%s6] sm:$0xf]
    %v1377 = vlaneseq
    %v1378 = vshrl.u32 %v1377, 7
    %v1379 = vsub.s32 0, %v1378
    %v1380 = vrot.slane %v1375, %v1379
    %v1381 = vlaneseq
    %v1382 = vshrl.u32 %v1381, 7
    %v1383 = vsub.s32 1, %v1382
    %v1384 = vrot.slane %v1375, %v1383
    %v1385 = vlaneseq
    %v1386 = vshrl.u32 %v1385, 7
    %v1387 = vsub.s32 2, %v1386
    %v1388 = vrot.slane %v1375, %v1387
    %v1389 = vlaneseq
    %v1390 = vshrl.u32 %v1389, 7
    %v1391 = vsub.s32 3, %v1390
    %v1392 = vrot.slane %v1375, %v1391
    %v1525 = vunpack.c.l.b16 %v1247
    %v1526 = vunpack.c.h.b16 %v1247
    %v1527 = vunpack.c.l.b16 %v1248
    %v1528 = vunpack.c.h.b16 %v1248
    %v1529 = vunpack.c.l.b16 %v1249
    %v1530 = vunpack.c.h.b16 %v1249
    %v1531 = vunpack.c.l.b16 %v1250
    %v1532 = vunpack.c.h.b16 %v1250
    %v1533 = vunpack.c.l.b16 %v1251
    %v1534 = vunpack.c.h.b16 %v1251
    %v1535 = vunpack.c.l.b16 %v1252
    %v1536 = vunpack.c.h.b16 %v1252
    %v1537 = vunpack.c.l.b16 %v1253
    %v1538 = vunpack.c.h.b16 %v1253
    %v1539 = vunpack.c.l.b16 %v1254
    %v1540 = vunpack.c.h.b16 %v1254
    %v1541 = vunpack.c.l.b16 %v1255
    %v1542 = vunpack.c.h.b16 %v1255
    %v1543 = vunpack.c.l.b16 %v1256
    %v1544 = vunpack.c.h.b16 %v1256
    %v1545 = vunpack.c.l.b16 %v1257
    %v1546 = vunpack.c.h.b16 %v1257
    %v1547 = vunpack.c.l.b16 %v1258
    %v1548 = vunpack.c.h.b16 %v1258
    %v1549 = vunpack.c.l.b16 %v1259
    %v1550 = vunpack.c.h.b16 %v1259
    %v1551 = vunpack.c.l.b16 %v1260
    %v1552 = vunpack.c.h.b16 %v1260
    %v1553 = vunpack.c.l.b16 %v1261
    %v1554 = vunpack.c.h.b16 %v1261
    %v1555 = vunpack.c.l.b16 %v1262
    %v1556 = vunpack.c.h.b16 %v1262
    %v1557 = vunpack.c.l.b16 %v1263
    %v1558 = vunpack.c.h.b16 %v1263
    %v1559 = vunpack.c.l.b16 %v1264
    %v1560 = vunpack.c.h.b16 %v1264
    %v1561 = vunpack.c.l.b16 %v1265
    %v1562 = vunpack.c.h.b16 %v1265
    %v1563 = vunpack.c.l.b16 %v1266
    %v1564 = vunpack.c.h.b16 %v1266
    %v1565 = vunpack.c.l.b16 %v1267
    %v1566 = vunpack.c.h.b16 %v1267
    %v1567 = vunpack.c.l.b16 %v1268
    %v1568 = vunpack.c.h.b16 %v1268
    %v1569 = vunpack.c.l.b16 %v1269
    %v1570 = vunpack.c.h.b16 %v1269
    %v1571 = vunpack.c.l.b16 %v1270
    %v1572 = vunpack.c.h.b16 %v1270
    %v1573 = vunpack.c.l.b16 %v1271
    %v1574 = vunpack.c.h.b16 %v1271
    %v1575 = vunpack.c.l.b16 %v1272
    %v1576 = vunpack.c.h.b16 %v1272
    %v1577 = vunpack.c.l.b16 %v1273
    %v1578 = vunpack.c.h.b16 %v1273
    %v1579 = vunpack.c.l.b16 %v1274
    %v1580 = vunpack.c.h.b16 %v1274
    %v1581 = vunpack.c.l.b16 %v1275
    %v1582 = vunpack.c.h.b16 %v1275
    %v1583 = vunpack.c.l.b16 %v1276
    %v1584 = vunpack.c.h.b16 %v1276
    %v1585 = vunpack.c.l.b16 %v1277
    %v1586 = vunpack.c.h.b16 %v1277
    %v1587 = vunpack.c.l.b16 %v1278
    %v1588 = vunpack.c.h.b16 %v1278
    %v1589 = vunpack.c.l.b16 %v1279
    %v1590 = vunpack.c.h.b16 %v1279
    %v1591 = vunpack.c.l.b16 %v1280
    %v1592 = vunpack.c.h.b16 %v1280
    %v1593 = vunpack.c.l.b16 %v1281
    %v1594 = vunpack.c.h.b16 %v1281
    %v1595 = vunpack.c.l.b16 %v1282
    %v1596 = vunpack.c.h.b16 %v1282
    %v1597 = vunpack.c.l.b16 %v1283
    %v1598 = vunpack.c.h.b16 %v1283
    %v1599 = vunpack.c.l.b16 %v1284
    %v1600 = vunpack.c.h.b16 %v1284
    %v1601 = vunpack.c.l.b16 %v1285
    %v1602 = vunpack.c.h.b16 %v1285
    %v1603 = vunpack.c.l.b16 %v1286
    %v1604 = vunpack.c.h.b16 %v1286
    %v1605 = vunpack.c.l.b16 %v1287
    %v1606 = vunpack.c.h.b16 %v1287
    %v1607 = vunpack.c.l.b16 %v1288
    %v1608 = vunpack.c.h.b16 %v1288
    %v1609 = vunpack.c.l.b16 %v1289
    %v1610 = vunpack.c.h.b16 %v1289
    %v1611 = vunpack.c.l.b16 %v1290
    %v1612 = vunpack.c.h.b16 %v1290
    %v1613 = vunpack.c.l.b16 %v1291
    %v1614 = vunpack.c.h.b16 %v1291
    %v1615 = vunpack.c.l.b16 %v1292
    %v1616 = vunpack.c.h.b16 %v1292
    %v1617 = vunpack.c.l.b16 %v1293
    %v1618 = vunpack.c.h.b16 %v1293
    %v1619 = vunpack.c.l.b16 %v1294
    %v1620 = vunpack.c.h.b16 %v1294
    %v1621 = vunpack.c.l.b16 %v1295
    %v1622 = vunpack.c.h.b16 %v1295
    %v1623 = vunpack.c.l.b16 %v1296
    %v1624 = vunpack.c.h.b16 %v1296
    %v1625 = vunpack.c.l.b16 %v1297
    %v1626 = vunpack.c.h.b16 %v1297
    %v1627 = vunpack.c.l.b16 %v1298
    %v1628 = vunpack.c.h.b16 %v1298
    %v1629 = vunpack.c.l.b16 %v1299
    %v1630 = vunpack.c.h.b16 %v1299
    %v1631 = vunpack.c.l.b16 %v1300
    %v1632 = vunpack.c.h.b16 %v1300
    %v1633 = vunpack.c.l.b16 %v1301
    %v1634 = vunpack.c.h.b16 %v1301
    %v1635 = vunpack.c.l.b16 %v1302
    %v1636 = vunpack.c.h.b16 %v1302
    %v1637 = vunpack.c.l.b16 %v1303
    %v1638 = vunpack.c.h.b16 %v1303
    %v1639 = vunpack.c.l.b16 %v1304
    %v1640 = vunpack.c.h.b16 %v1304
    %v1641 = vunpack.c.l.b16 %v1305
    %v1642 = vunpack.c.h.b16 %v1305
    %v1643 = vunpack.c.l.b16 %v1306
    %v1644 = vunpack.c.h.b16 %v1306
    %v1645 = vunpack.c.l.b16 %v1307
    %v1646 = vunpack.c.h.b16 %v1307
    %v1647 = vunpack.c.l.b16 %v1308
    %v1648 = vunpack.c.h.b16 %v1308
    %v1649 = vunpack.c.l.b16 %v1309
    %v1650 = vunpack.c.h.b16 %v1309
    %v1651 = vunpack.c.l.b16 %v1310
    %v1652 = vunpack.c.h.b16 %v1310
    %v1653 = vunpack.c.l.b16 %v1311
    %v1654 = vunpack.c.h.b16 %v1311
    %v1655 = vunpack.c.l.b16 %v1312
    %v1656 = vunpack.c.h.b16 %v1312
    %v1657 = vunpack.c.l.b16 %v1313
    %v1658 = vunpack.c.h.b16 %v1313
    %v1659 = vunpack.c.l.b16 %v1314
    %v1660 = vunpack.c.h.b16 %v1314
    %v1661 = vunpack.c.l.b16 %v1315
    %v1662 = vunpack.c.h.b16 %v1315
    %v1663 = vunpack.c.l.b16 %v1316
    %v1664 = vunpack.c.h.b16 %v1316
    %v1665 = vunpack.c.l.b16 %v1317
    %v1666 = vunpack.c.h.b16 %v1317
    %v1667 = vunpack.c.l.b16 %v1318
    %v1668 = vunpack.c.h.b16 %v1318
    %v1669 = vunpack.c.l.b16 %v1319
    %v1670 = vunpack.c.h.b16 %v1319
    %v1671 = vunpack.c.l.b16 %v1320
    %v1672 = vunpack.c.h.b16 %v1320
    %v1673 = vunpack.c.l.b16 %v1321
    %v1674 = vunpack.c.h.b16 %v1321
    %v1675 = vunpack.c.l.b16 %v1322
    %v1676 = vunpack.c.h.b16 %v1322
    %v1677 = vunpack.c.l.b16 %v1323
    %v1678 = vunpack.c.h.b16 %v1323
    %v1679 = vunpack.c.l.b16 %v1324
    %v1680 = vunpack.c.h.b16 %v1324
    %v1681 = vunpack.c.l.b16 %v1325
    %v1682 = vunpack.c.h.b16 %v1325
    %v1683 = vunpack.c.l.b16 %v1326
    %v1684 = vunpack.c.h.b16 %v1326
    %v1685 = vunpack.c.l.b16 %v1327
    %v1686 = vunpack.c.h.b16 %v1327
    %v1687 = vunpack.c.l.b16 %v1328
    %v1688 = vunpack.c.h.b16 %v1328
    %v1689 = vunpack.c.l.b16 %v1329
    %v1690 = vunpack.c.h.b16 %v1329
    %v1691 = vunpack.c.l.b16 %v1330
    %v1692 = vunpack.c.h.b16 %v1330
    %v1693 = vunpack.c.l.b16 %v1331
    %v1694 = vunpack.c.h.b16 %v1331
    %v1695 = vunpack.c.l.b16 %v1332
    %v1696 = vunpack.c.h.b16 %v1332
    %v1697 = vunpack.c.l.b16 %v1333
    %v1698 = vunpack.c.h.b16 %v1333
    %v1699 = vunpack.c.l.b16 %v1334
    %v1700 = vunpack.c.h.b16 %v1334
    %v1701 = vunpack.c.l.b16 %v1335
    %v1702 = vunpack.c.h.b16 %v1335
    %v1703 = vunpack.c.l.b16 %v1336
    %v1704 = vunpack.c.h.b16 %v1336
    %v1705 = vunpack.c.l.b16 %v1337
    %v1706 = vunpack.c.h.b16 %v1337
    %v1707 = vunpack.c.l.b16 %v1338
    %v1708 = vunpack.c.h.b16 %v1338
    %v1709 = vunpack.c.l.b16 %v1339
    %v1710 = vunpack.c.h.b16 %v1339
    %v1711 = vunpack.c.l.b16 %v1340
    %v1712 = vunpack.c.h.b16 %v1340
    %v1713 = vunpack.c.l.b16 %v1341
    %v1714 = vunpack.c.h.b16 %v1341
    %v1715 = vunpack.c.l.b16 %v1342
    %v1716 = vunpack.c.h.b16 %v1342
    %v1717 = vunpack.c.l.b16 %v1343
    %v1718 = vunpack.c.h.b16 %v1343
    %v1719 = vunpack.c.l.b16 %v1344
    %v1720 = vunpack.c.h.b16 %v1344
    %v1721 = vunpack.c.l.b16 %v1345
    %v1722 = vunpack.c.h.b16 %v1345
    %v1723 = vunpack.c.l.b16 %v1346
    %v1724 = vunpack.c.h.b16 %v1346
    %v1725 = vunpack.c.l.b16 %v1347
    %v1726 = vunpack.c.h.b16 %v1347
    %v1727 = vunpack.c.l.b16 %v1348
    %v1728 = vunpack.c.h.b16 %v1348
    %v1729 = vunpack.c.l.b16 %v1349
    %v1730 = vunpack.c.h.b16 %v1349
    %v1731 = vunpack.c.l.b16 %v1350
    %v1732 = vunpack.c.h.b16 %v1350
    %v1733 = vunpack.c.l.b16 %v1351
    %v1734 = vunpack.c.h.b16 %v1351
    %v1735 = vunpack.c.l.b16 %v1352
    %v1736 = vunpack.c.h.b16 %v1352
    %v1737 = vunpack.c.l.b16 %v1353
    %v1738 = vunpack.c.h.b16 %v1353
    %v1739 = vunpack.c.l.b16 %v1354
    %v1740 = vunpack.c.h.b16 %v1354
    %v1741 = vunpack.c.l.b16 %v1355
    %v1742 = vunpack.c.h.b16 %v1355
    %v1743 = vunpack.c.l.b16 %v1356
    %v1744 = vunpack.c.h.b16 %v1356
    %v1745 = vunpack.c.l.b16 %v1357
    %v1746 = vunpack.c.h.b16 %v1357
    %v1747 = vunpack.c.l.b16 %v1358
    %v1748 = vunpack.c.h.b16 %v1358
    %v1749 = vunpack.c.l.b16 %v1359
    %v1750 = vunpack.c.h.b16 %v1359
    %v1751 = vunpack.c.l.b16 %v1360
    %v1752 = vunpack.c.h.b16 %v1360
    %v1753 = vunpack.c.l.b16 %v1361
    %v1754 = vunpack.c.h.b16 %v1361
    %v1755 = vunpack.c.l.b16 %v1362
    %v1756 = vunpack.c.h.b16 %v1362
    %v1757 = vunpack.c.l.b16 %v1363
    %v1758 = vunpack.c.h.b16 %v1363
    %v1759 = vunpack.c.l.b16 %v1364
    %v1760 = vunpack.c.h.b16 %v1364
    %v1761 = vunpack.c.l.b16 %v1365
    %v1762 = vunpack.c.h.b16 %v1365
    %v1763 = vunpack.c.l.b16 %v1366
    %v1764 = vunpack.c.h.b16 %v1366
    %v1765 = vunpack.c.l.b16 %v1367
    %v1766 = vunpack.c.h.b16 %v1367
    %v1767 = vunpack.c.l.b16 %v1368
    %v1768 = vunpack.c.h.b16 %v1368
    %v1769 = vunpack.c.l.b16 %v1369
    %v1770 = vunpack.c.h.b16 %v1369
    %v1771 = vunpack.c.l.b16 %v1370
    %v1772 = vunpack.c.h.b16 %v1370
    %v1773 = vunpack.c.l.b16 %v1371
    %v1774 = vunpack.c.h.b16 %v1371
    %v1775 = vunpack.c.l.b16 %v1372
    %v1776 = vunpack.c.h.b16 %v1372
    %v1777 = vunpack.c.l.b16 %v1373
    %v1778 = vunpack.c.h.b16 %v1373
    %v1779 = vunpack.c.l.b16 %v1374
    %v1780 = vunpack.c.h.b16 %v1374
    %v1781 = vpack.c.b16 %v1529, %v1525
    %v1782 = vpack.c.b16 %v1530, %v1526
    %v1783 = vpack.c.b16 %v1531, %v1527
    %v1784 = vpack.c.b16 %v1532, %v1528
    %v1785 = vpack.c.b16 %v1537, %v1533
    %v1786 = vpack.c.b16 %v1538, %v1534
    %v1787 = vpack.c.b16 %v1539, %v1535
    %v1788 = vpack.c.b16 %v1540, %v1536
    %v1789 = vpack.c.b16 %v1545, %v1541
    %v1790 = vpack.c.b16 %v1546, %v1542
    %v1791 = vpack.c.b16 %v1547, %v1543
    %v1792 = vpack.c.b16 %v1548, %v1544
    %v1793 = vpack.c.b16 %v1553, %v1549
    %v1794 = vpack.c.b16 %v1554, %v1550
    %v1795 = vpack.c.b16 %v1555, %v1551
    %v1796 = vpack.c.b16 %v1556, %v1552
    %v1797 = vpack.c.b16 %v1561, %v1557
    %v1798 = vpack.c.b16 %v1562, %v1558
    %v1799 = vpack.c.b16 %v1563, %v1559
    %v1800 = vpack.c.b16 %v1564, %v1560
    %v1801 = vpack.c.b16 %v1569, %v1565
    %v1802 = vpack.c.b16 %v1570, %v1566
    %v1803 = vpack.c.b16 %v1571, %v1567
    %v1804 = vpack.c.b16 %v1572, %v1568
    %v1805 = vpack.c.b16 %v1577, %v1573
    %v1806 = vpack.c.b16 %v1578, %v1574
    %v1807 = vpack.c.b16 %v1579, %v1575
    %v1808 = vpack.c.b16 %v1580, %v1576
    %v1809 = vpack.c.b16 %v1585, %v1581
    %v1810 = vpack.c.b16 %v1586, %v1582
    %v1811 = vpack.c.b16 %v1587, %v1583
    %v1812 = vpack.c.b16 %v1588, %v1584
    %v1813 = vpack.c.b16 %v1593, %v1589
    %v1814 = vpack.c.b16 %v1594, %v1590
    %v1815 = vpack.c.b16 %v1595, %v1591
    %v1816 = vpack.c.b16 %v1596, %v1592
    %v1817 = vpack.c.b16 %v1601, %v1597
    %v1818 = vpack.c.b16 %v1602, %v1598
    %v1819 = vpack.c.b16 %v1603, %v1599
    %v1820 = vpack.c.b16 %v1604, %v1600
    %v1821 = vpack.c.b16 %v1609, %v1605
    %v1822 = vpack.c.b16 %v1610, %v1606
    %v1823 = vpack.c.b16 %v1611, %v1607
    %v1824 = vpack.c.b16 %v1612, %v1608
    %v1825 = vpack.c.b16 %v1617, %v1613
    %v1826 = vpack.c.b16 %v1618, %v1614
    %v1827 = vpack.c.b16 %v1619, %v1615
    %v1828 = vpack.c.b16 %v1620, %v1616
    %v1829 = vpack.c.b16 %v1625, %v1621
    %v1830 = vpack.c.b16 %v1626, %v1622
    %v1831 = vpack.c.b16 %v1627, %v1623
    %v1832 = vpack.c.b16 %v1628, %v1624
    %v1833 = vpack.c.b16 %v1633, %v1629
    %v1834 = vpack.c.b16 %v1634, %v1630
    %v1835 = vpack.c.b16 %v1635, %v1631
    %v1836 = vpack.c.b16 %v1636, %v1632
    %v1837 = vpack.c.b16 %v1641, %v1637
    %v1838 = vpack.c.b16 %v1642, %v1638
    %v1839 = vpack.c.b16 %v1643, %v1639
    %v1840 = vpack.c.b16 %v1644, %v1640
    %v1841 = vpack.c.b16 %v1649, %v1645
    %v1842 = vpack.c.b16 %v1650, %v1646
    %v1843 = vpack.c.b16 %v1651, %v1647
    %v1844 = vpack.c.b16 %v1652, %v1648
    %v1845 = vpack.c.b16 %v1657, %v1653
    %v1846 = vpack.c.b16 %v1658, %v1654
    %v1847 = vpack.c.b16 %v1659, %v1655
    %v1848 = vpack.c.b16 %v1660, %v1656
    %v1849 = vpack.c.b16 %v1665, %v1661
    %v1850 = vpack.c.b16 %v1666, %v1662
    %v1851 = vpack.c.b16 %v1667, %v1663
    %v1852 = vpack.c.b16 %v1668, %v1664
    %v1853 = vpack.c.b16 %v1673, %v1669
    %v1854 = vpack.c.b16 %v1674, %v1670
    %v1855 = vpack.c.b16 %v1675, %v1671
    %v1856 = vpack.c.b16 %v1676, %v1672
    %v1857 = vpack.c.b16 %v1681, %v1677
    %v1858 = vpack.c.b16 %v1682, %v1678
    %v1859 = vpack.c.b16 %v1683, %v1679
    %v1860 = vpack.c.b16 %v1684, %v1680
    %v1861 = vpack.c.b16 %v1689, %v1685
    %v1862 = vpack.c.b16 %v1690, %v1686
    %v1863 = vpack.c.b16 %v1691, %v1687
    %v1864 = vpack.c.b16 %v1692, %v1688
    %v1865 = vpack.c.b16 %v1697, %v1693
    %v1866 = vpack.c.b16 %v1698, %v1694
    %v1867 = vpack.c.b16 %v1699, %v1695
    %v1868 = vpack.c.b16 %v1700, %v1696
    %v1869 = vpack.c.b16 %v1705, %v1701
    %v1870 = vpack.c.b16 %v1706, %v1702
    %v1871 = vpack.c.b16 %v1707, %v1703
    %v1872 = vpack.c.b16 %v1708, %v1704
    %v1873 = vpack.c.b16 %v1713, %v1709
    %v1874 = vpack.c.b16 %v1714, %v1710
    %v1875 = vpack.c.b16 %v1715, %v1711
    %v1876 = vpack.c.b16 %v1716, %v1712
    %v1877 = vpack.c.b16 %v1721, %v1717
    %v1878 = vpack.c.b16 %v1722, %v1718
    %v1879 = vpack.c.b16 %v1723, %v1719
    %v1880 = vpack.c.b16 %v1724, %v1720
    %v1881 = vpack.c.b16 %v1729, %v1725
    %v1882 = vpack.c.b16 %v1730, %v1726
    %v1883 = vpack.c.b16 %v1731, %v1727
    %v1884 = vpack.c.b16 %v1732, %v1728
    %v1885 = vpack.c.b16 %v1737, %v1733
    %v1886 = vpack.c.b16 %v1738, %v1734
    %v1887 = vpack.c.b16 %v1739, %v1735
    %v1888 = vpack.c.b16 %v1740, %v1736
    %v1889 = vpack.c.b16 %v1745, %v1741
    %v1890 = vpack.c.b16 %v1746, %v1742
    %v1891 = vpack.c.b16 %v1747, %v1743
    %v1892 = vpack.c.b16 %v1748, %v1744
    %v1893 = vpack.c.b16 %v1753, %v1749
    %v1894 = vpack.c.b16 %v1754, %v1750
    %v1895 = vpack.c.b16 %v1755, %v1751
    %v1896 = vpack.c.b16 %v1756, %v1752
    %v1897 = vpack.c.b16 %v1761, %v1757
    %v1898 = vpack.c.b16 %v1762, %v1758
    %v1899 = vpack.c.b16 %v1763, %v1759
    %v1900 = vpack.c.b16 %v1764, %v1760
    %v1901 = vpack.c.b16 %v1769, %v1765
    %v1902 = vpack.c.b16 %v1770, %v1766
    %v1903 = vpack.c.b16 %v1771, %v1767
    %v1904 = vpack.c.b16 %v1772, %v1768
    %v1905 = vpack.c.b16 %v1777, %v1773
    %v1906 = vpack.c.b16 %v1778, %v1774
    %v1907 = vpack.c.b16 %v1779, %v1775
    %v1908 = vpack.c.b16 %v1780, %v1776
    %2037 = vmatprep.subr.bf16.mxu0 %v1782
    %2038 = vmatpush1.bf16.msra.mxu0 %v1781
    %2039 = vmatprep.subr.bf16.mxu0 %v1786
    %2040 = vmatpush1.bf16.msra.mxu0 %v1785
    %2041 = vmatprep.subr.bf16.mxu0 %v1790
    %2042 = vmatpush1.bf16.msra.mxu0 %v1789
    %2043 = vmatprep.subr.bf16.mxu0 %v1794
    %2044 = vmatpush1.bf16.msra.mxu0 %v1793
    %2045 = vmatprep.subr.bf16.mxu0 %v1798
    %2046 = vmatpush1.bf16.msra.mxu0 %v1797
    %2047 = vmatprep.subr.bf16.mxu0 %v1802
    %2048 = vmatpush1.bf16.msra.mxu0 %v1801
    %2049 = vmatprep.subr.bf16.mxu0 %v1806
    %2050 = vmatpush1.bf16.msra.mxu0 %v1805
    %2051 = vmatprep.subr.bf16.mxu0 %v1810
    %2052 = vmatpush1.bf16.msra.mxu0 %v1809
    %2053 = vmatprep.subr.bf16.mxu0 %v1814
    %2054 = vmatpush1.bf16.msra.mxu0 %v1813
    %2055 = vmatprep.subr.bf16.mxu0 %v1818
    %2056 = vmatpush1.bf16.msra.mxu0 %v1817
    %2057 = vmatprep.subr.bf16.mxu0 %v1822
    %2058 = vmatpush1.bf16.msra.mxu0 %v1821
    %2059 = vmatprep.subr.bf16.mxu0 %v1826
    %2060 = vmatpush1.bf16.msra.mxu0 %v1825
    %2061 = vmatprep.subr.bf16.mxu0 %v1830
    %2062 = vmatpush1.bf16.msra.mxu0 %v1829
    %2063 = vmatprep.subr.bf16.mxu0 %v1834
    %2064 = vmatpush1.bf16.msra.mxu0 %v1833
    %2065 = vmatprep.subr.bf16.mxu0 %v1838
    %2066 = vmatpush1.bf16.msra.mxu0 %v1837
    %2067 = vmatprep.subr.bf16.mxu0 %v1842
    %2068 = vmatpush1.bf16.msra.mxu0 %v1841
    %2069 = vmatprep.mubr.bf16.mxu0 %v1244
    %2070 = vmatmul.mubr.bf16.gmra.mrb[0].mxu0 %v1243
    %v2071 = vpop.f32.mrb[0].mxu0
    %v2072 = vadd.f32 %v1380, %v2071
    %v2073 = vpop.f32.mrb[0].mxu0
    %v2074 = vadd.f32 %v1384, %v2073
    %v2075 = vpop.f32.mrb[0].mxu0
    %v2076 = vadd.f32 %v1380, %v2075
    %v2077 = vpop.f32.mrb[0].mxu0
    %v2078 = vadd.f32 %v1384, %v2077
    %2079 = vdwg.mxu0
    %2080 = vmatprep.subr.bf16.mxu0 %v1846
    %2081 = vmatpush1.bf16.msra.mxu0 %v1845
    %2082 = vmatprep.subr.bf16.mxu0 %v1850
    %2083 = vmatpush1.bf16.msra.mxu0 %v1849
    %2084 = vmatprep.subr.bf16.mxu0 %v1854
    %2085 = vmatpush1.bf16.msra.mxu0 %v1853
    %2086 = vmatprep.subr.bf16.mxu0 %v1858
    %2087 = vmatpush1.bf16.msra.mxu0 %v1857
    %2088 = vmatprep.subr.bf16.mxu0 %v1862
    %2089 = vmatpush1.bf16.msra.mxu0 %v1861
    %2090 = vmatprep.subr.bf16.mxu0 %v1866
    %2091 = vmatpush1.bf16.msra.mxu0 %v1865
    %2092 = vmatprep.subr.bf16.mxu0 %v1870
    %2093 = vmatpush1.bf16.msra.mxu0 %v1869
    %2094 = vmatprep.subr.bf16.mxu0 %v1874
    %2095 = vmatpush1.bf16.msra.mxu0 %v1873
    %2096 = vmatprep.subr.bf16.mxu0 %v1878
    %2097 = vmatpush1.bf16.msra.mxu0 %v1877
    %2098 = vmatprep.subr.bf16.mxu0 %v1882
    %2099 = vmatpush1.bf16.msra.mxu0 %v1881
    %2100 = vmatprep.subr.bf16.mxu0 %v1886
    %2101 = vmatpush1.bf16.msra.mxu0 %v1885
    %2102 = vmatprep.subr.bf16.mxu0 %v1890
    %2103 = vmatpush1.bf16.msra.mxu0 %v1889
    %2104 = vmatprep.subr.bf16.mxu0 %v1894
    %2105 = vmatpush1.bf16.msra.mxu0 %v1893
    %2106 = vmatprep.subr.bf16.mxu0 %v1898
    %2107 = vmatpush1.bf16.msra.mxu0 %v1897
    %2108 = vmatprep.subr.bf16.mxu0 %v1902
    %2109 = vmatpush1.bf16.msra.mxu0 %v1901
    %2110 = vmatprep.subr.bf16.mxu0 %v1906
    %2111 = vmatpush1.bf16.msra.mxu0 %v1905
    %2112 = vmatprep.mubr.bf16.mxu0 %v1246
    %2113 = vmatmul.mubr.bf16.gmra.mrb[0].mxu0 %v1245
    %v2114 = vpop.f32.mrb[0].mxu0
    %v2115 = vadd.f32 %v2072, %v2114
    %v2116 = vpop.f32.mrb[0].mxu0
    %v2117 = vadd.f32 %v2074, %v2116
    %v2118 = vpop.f32.mrb[0].mxu0
    %v2119 = vadd.f32 %v2076, %v2118
    %v2120 = vpop.f32.mrb[0].mxu0
    %v2121 = vadd.f32 %v2078, %v2120
    %2122 = vdwg.mxu0
    %2123 = vmatprep.subr.bf16.mxu0 %v1784
    %2124 = vmatpush1.bf16.msra.mxu0 %v1783
    %2125 = vmatprep.subr.bf16.mxu0 %v1788
    %2126 = vmatpush1.bf16.msra.mxu0 %v1787
    %2127 = vmatprep.subr.bf16.mxu0 %v1792
    %2128 = vmatpush1.bf16.msra.mxu0 %v1791
    %2129 = vmatprep.subr.bf16.mxu0 %v1796
    %2130 = vmatpush1.bf16.msra.mxu0 %v1795
    %2131 = vmatprep.subr.bf16.mxu0 %v1800
    %2132 = vmatpush1.bf16.msra.mxu0 %v1799
    %2133 = vmatprep.subr.bf16.mxu0 %v1804
    %2134 = vmatpush1.bf16.msra.mxu0 %v1803
    %2135 = vmatprep.subr.bf16.mxu0 %v1808
    %2136 = vmatpush1.bf16.msra.mxu0 %v1807
    %2137 = vmatprep.subr.bf16.mxu0 %v1812
    %2138 = vmatpush1.bf16.msra.mxu0 %v1811
    %2139 = vmatprep.subr.bf16.mxu0 %v1816
    %2140 = vmatpush1.bf16.msra.mxu0 %v1815
    %2141 = vmatprep.subr.bf16.mxu0 %v1820
    %2142 = vmatpush1.bf16.msra.mxu0 %v1819
    %2143 = vmatprep.subr.bf16.mxu0 %v1824
    %2144 = vmatpush1.bf16.msra.mxu0 %v1823
    %2145 = vmatprep.subr.bf16.mxu0 %v1828
    %2146 = vmatpush1.bf16.msra.mxu0 %v1827
    %2147 = vmatprep.subr.bf16.mxu0 %v1832
    %2148 = vmatpush1.bf16.msra.mxu0 %v1831
    %2149 = vmatprep.subr.bf16.mxu0 %v1836
    %2150 = vmatpush1.bf16.msra.mxu0 %v1835
    %2151 = vmatprep.subr.bf16.mxu0 %v1840
    %2152 = vmatpush1.bf16.msra.mxu0 %v1839
    %2153 = vmatprep.subr.bf16.mxu0 %v1844
    %2154 = vmatpush1.bf16.msra.mxu0 %v1843
    %2155 = vmatprep.mubr.bf16.mxu0 %v1244
    %2156 = vmatmul.mubr.bf16.gmra.mrb[0].mxu0 %v1243
    %v2157 = vpop.f32.mrb[0].mxu0
    %v2158 = vadd.f32 %v1388, %v2157
    %v2159 = vpop.f32.mrb[0].mxu0
    %v2160 = vadd.f32 %v1392, %v2159
    %v2161 = vpop.f32.mrb[0].mxu0
    %v2162 = vadd.f32 %v1388, %v2161
    %v2163 = vpop.f32.mrb[0].mxu0
    %v2164 = vadd.f32 %v1392, %v2163
    %2165 = vdwg.mxu0
    %2166 = vmatprep.subr.bf16.mxu0 %v1848
    %2167 = vmatpush1.bf16.msra.mxu0 %v1847
    %2168 = vmatprep.subr.bf16.mxu0 %v1852
    %2169 = vmatpush1.bf16.msra.mxu0 %v1851
    %2170 = vmatprep.subr.bf16.mxu0 %v1856
    %2171 = vmatpush1.bf16.msra.mxu0 %v1855
    %2172 = vmatprep.subr.bf16.mxu0 %v1860
    %2173 = vmatpush1.bf16.msra.mxu0 %v1859
    %2174 = vmatprep.subr.bf16.mxu0 %v1864
    %2175 = vmatpush1.bf16.msra.mxu0 %v1863
    %2176 = vmatprep.subr.bf16.mxu0 %v1868
    %2177 = vmatpush1.bf16.msra.mxu0 %v1867
    %2178 = vmatprep.subr.bf16.mxu0 %v1872
    %2179 = vmatpush1.bf16.msra.mxu0 %v1871
    %2180 = vmatprep.subr.bf16.mxu0 %v1876
    %2181 = vmatpush1.bf16.msra.mxu0 %v1875
    %2182 = vmatprep.subr.bf16.mxu0 %v1880
    %2183 = vmatpush1.bf16.msra.mxu0 %v1879
    %2184 = vmatprep.subr.bf16.mxu0 %v1884
    %2185 = vmatpush1.bf16.msra.mxu0 %v1883
    %2186 = vmatprep.subr.bf16.mxu0 %v1888
    %2187 = vmatpush1.bf16.msra.mxu0 %v1887
    %2188 = vmatprep.subr.bf16.mxu0 %v1892
    %2189 = vmatpush1.bf16.msra.mxu0 %v1891
    %2190 = vmatprep.subr.bf16.mxu0 %v1896
    %2191 = vmatpush1.bf16.msra.mxu0 %v1895
    %2192 = vmatprep.subr.bf16.mxu0 %v1900
    %2193 = vmatpush1.bf16.msra.mxu0 %v1899
    %2194 = vmatprep.subr.bf16.mxu0 %v1904
    %2195 = vmatpush1.bf16.msra.mxu0 %v1903
    %2196 = vmatprep.subr.bf16.mxu0 %v1908
    %2197 = vmatpush1.bf16.msra.mxu0 %v1907
    %2198 = vmatprep.mubr.bf16.mxu0 %v1246
    %2199 = vmatmul.mubr.bf16.gmra.mrb[0].mxu0 %v1245
    %v2200 = vpop.f32.mrb[0].mxu0
    %v2201 = vadd.f32 %v2158, %v2200
    %v2202 = vpop.f32.mrb[0].mxu0
    %v2203 = vadd.f32 %v2160, %v2202
    %v2204 = vpop.f32.mrb[0].mxu0
    %v2205 = vadd.f32 %v2162, %v2204
    %v2206 = vpop.f32.mrb[0].mxu0
    %v2207 = vadd.f32 %v2164, %v2206
    %2208 = vdwg.mxu0
    %v2209 = vmul.f32 %v2115, 0.01
    %v2210 = vmul.f32 %v2117, 0.01
    %v2211 = vmul.f32 %v2201, 0.01
    %v2212 = vmul.f32 %v2203, 0.01
    %v2213 = vmul.f32 %v2119, 0.01
    %v2214 = vmul.f32 %v2121, 0.01
    %v2215 = vmul.f32 %v2205, 0.01
    %v2216 = vmul.f32 %v2207, 0.01
    %v2217 = vmax.f32 %v2115, %v2209
    %v2218 = vmax.f32 %v2117, %v2210
    %v2219 = vmax.f32 %v2201, %v2211
    %v2220 = vmax.f32 %v2203, %v2212
    %v2221 = vmax.f32 %v2119, %v2213
    %v2222 = vmax.f32 %v2121, %v2214
    %v2223 = vmax.f32 %v2205, %v2215
    %v2224 = vmax.f32 %v2207, %v2216
    %v2225 = vpack.c.bf16 %v2221, %v2217
    %v2226 = vpack.c.bf16 %v2222, %v2218
    %v2227 = vpack.c.bf16 %v2223, %v2219
    %v2228 = vpack.c.bf16 %v2224, %v2220
    %v2229 = vld [vmem:[#allocation10] sm:$0xff]
    %v2230 = vld [vmem:[#allocation10 + $0x8] sm:$0xff]
    %v2231 = vld [vmem:[#allocation10 + $0x10] sm:$0xff]
    %v2232 = vld [vmem:[#allocation10 + $0x18] sm:$0xff]
    %v2233 = vld [vmem:[#allocation10 + $0x20] sm:$0xff]
    %v2234 = vld [vmem:[#allocation10 + $0x28] sm:$0xff]
    %v2235 = vld [vmem:[#allocation10 + $0x30] sm:$0xff]
    %v2236 = vld [vmem:[#allocation10 + $0x38] sm:$0xff]
    %v2237 = vld [vmem:[#allocation10 + $0x40] sm:$0xff]
    %v2238 = vld [vmem:[#allocation10 + $0x48] sm:$0xff]
    %v2239 = vld [vmem:[#allocation10 + $0x50] sm:$0xff]
    %v2240 = vld [vmem:[#allocation10 + $0x58] sm:$0xff]
    %v2241 = vld [vmem:[#allocation10 + $0x60] sm:$0xff]
    %v2242 = vld [vmem:[#allocation10 + $0x68] sm:$0xff]
    %v2243 = vld [vmem:[#allocation10 + $0x70] sm:$0xff]
    %v2244 = vld [vmem:[#allocation10 + $0x78] sm:$0xff]
    %v2245 = vld [vmem:[#allocation10 + $0x80] sm:$0xff]
    %v2246 = vld [vmem:[#allocation10 + $0x88] sm:$0xff]
    %v2247 = vld [vmem:[#allocation10 + $0x90] sm:$0xff]
    %v2248 = vld [vmem:[#allocation10 + $0x98] sm:$0xff]
    %v2249 = vld [vmem:[#allocation10 + $0xa0] sm:$0xff]
    %v2250 = vld [vmem:[#allocation10 + $0xa8] sm:$0xff]
    %v2251 = vld [vmem:[#allocation10 + $0xb0] sm:$0xff]
    %v2252 = vld [vmem:[#allocation10 + $0xb8] sm:$0xff]
    %v2253 = vld [vmem:[#allocation10 + $0xc0] sm:$0xff]
    %v2254 = vld [vmem:[#allocation10 + $0xc8] sm:$0xff]
    %v2255 = vld [vmem:[#allocation10 + $0xd0] sm:$0xff]
    %v2256 = vld [vmem:[#allocation10 + $0xd8] sm:$0xff]
    %v2257 = vld [vmem:[#allocation10 + $0xe0] sm:$0xff]
    %v2258 = vld [vmem:[#allocation10 + $0xe8] sm:$0xff]
    %v2259 = vld [vmem:[#allocation10 + $0xf0] sm:$0xff]
    %v2260 = vld [vmem:[#allocation10 + $0xf8] sm:$0xff]
    %v2261 = vld [vmem:[#allocation10 + $0x100] sm:$0xff]
    %v2262 = vld [vmem:[#allocation10 + $0x108] sm:$0xff]
    %v2263 = vld [vmem:[#allocation10 + $0x110] sm:$0xff]
    %v2264 = vld [vmem:[#allocation10 + $0x118] sm:$0xff]
    %v2265 = vld [vmem:[#allocation10 + $0x120] sm:$0xff]
    %v2266 = vld [vmem:[#allocation10 + $0x128] sm:$0xff]
    %v2267 = vld [vmem:[#allocation10 + $0x130] sm:$0xff]
    %v2268 = vld [vmem:[#allocation10 + $0x138] sm:$0xff]
    %v2269 = vld [vmem:[#allocation10 + $0x140] sm:$0xff]
    %v2270 = vld [vmem:[#allocation10 + $0x148] sm:$0xff]
    %v2271 = vld [vmem:[#allocation10 + $0x150] sm:$0xff]
    %v2272 = vld [vmem:[#allocation10 + $0x158] sm:$0xff]
    %v2273 = vld [vmem:[#allocation10 + $0x160] sm:$0xff]
    %v2274 = vld [vmem:[#allocation10 + $0x168] sm:$0xff]
    %v2275 = vld [vmem:[#allocation10 + $0x170] sm:$0xff]
    %v2276 = vld [vmem:[#allocation10 + $0x178] sm:$0xff]
    %v2277 = vld [vmem:[#allocation10 + $0x180] sm:$0xff]
    %v2278 = vld [vmem:[#allocation10 + $0x188] sm:$0xff]
    %v2279 = vld [vmem:[#allocation10 + $0x190] sm:$0xff]
    %v2280 = vld [vmem:[#allocation10 + $0x198] sm:$0xff]
    %v2281 = vld [vmem:[#allocation10 + $0x1a0] sm:$0xff]
    %v2282 = vld [vmem:[#allocation10 + $0x1a8] sm:$0xff]
    %v2283 = vld [vmem:[#allocation10 + $0x1b0] sm:$0xff]
    %v2284 = vld [vmem:[#allocation10 + $0x1b8] sm:$0xff]
    %v2285 = vld [vmem:[#allocation10 + $0x1c0] sm:$0xff]
    %v2286 = vld [vmem:[#allocation10 + $0x1c8] sm:$0xff]
    %v2287 = vld [vmem:[#allocation10 + $0x1d0] sm:$0xff]
    %v2288 = vld [vmem:[#allocation10 + $0x1d8] sm:$0xff]
    %v2289 = vld [vmem:[#allocation10 + $0x1e0] sm:$0xff]
    %v2290 = vld [vmem:[#allocation10 + $0x1e8] sm:$0xff]
    %v2291 = vld [vmem:[#allocation10 + $0x1f0] sm:$0xff]
    %v2292 = vld [vmem:[#allocation10 + $0x1f8] sm:$0xff]
    %v2293 = vld [vmem:[#allocation10 + $0x200] sm:$0xff]
    %v2294 = vld [vmem:[#allocation10 + $0x208] sm:$0xff]
    %v2295 = vld [vmem:[#allocation10 + $0x210] sm:$0xff]
    %v2296 = vld [vmem:[#allocation10 + $0x218] sm:$0xff]
    %v2297 = vld [vmem:[#allocation10 + $0x220] sm:$0xff]
    %v2298 = vld [vmem:[#allocation10 + $0x228] sm:$0xff]
    %v2299 = vld [vmem:[#allocation10 + $0x230] sm:$0xff]
    %v2300 = vld [vmem:[#allocation10 + $0x238] sm:$0xff]
    %v2301 = vld [vmem:[#allocation10 + $0x240] sm:$0xff]
    %v2302 = vld [vmem:[#allocation10 + $0x248] sm:$0xff]
    %v2303 = vld [vmem:[#allocation10 + $0x250] sm:$0xff]
    %v2304 = vld [vmem:[#allocation10 + $0x258] sm:$0xff]
    %v2305 = vld [vmem:[#allocation10 + $0x260] sm:$0xff]
    %v2306 = vld [vmem:[#allocation10 + $0x268] sm:$0xff]
    %v2307 = vld [vmem:[#allocation10 + $0x270] sm:$0xff]
    %v2308 = vld [vmem:[#allocation10 + $0x278] sm:$0xff]
    %v2309 = vld [vmem:[#allocation10 + $0x280] sm:$0xff]
    %v2310 = vld [vmem:[#allocation10 + $0x288] sm:$0xff]
    %v2311 = vld [vmem:[#allocation10 + $0x290] sm:$0xff]
    %v2312 = vld [vmem:[#allocation10 + $0x298] sm:$0xff]
    %v2313 = vld [vmem:[#allocation10 + $0x2a0] sm:$0xff]
    %v2314 = vld [vmem:[#allocation10 + $0x2a8] sm:$0xff]
    %v2315 = vld [vmem:[#allocation10 + $0x2b0] sm:$0xff]
    %v2316 = vld [vmem:[#allocation10 + $0x2b8] sm:$0xff]
    %v2317 = vld [vmem:[#allocation10 + $0x2c0] sm:$0xff]
    %v2318 = vld [vmem:[#allocation10 + $0x2c8] sm:$0xff]
    %v2319 = vld [vmem:[#allocation10 + $0x2d0] sm:$0xff]
    %v2320 = vld [vmem:[#allocation10 + $0x2d8] sm:$0xff]
    %v2321 = vld [vmem:[#allocation10 + $0x2e0] sm:$0xff]
    %v2322 = vld [vmem:[#allocation10 + $0x2e8] sm:$0xff]
    %v2323 = vld [vmem:[#allocation10 + $0x2f0] sm:$0xff]
    %v2324 = vld [vmem:[#allocation10 + $0x2f8] sm:$0xff]
    %v2325 = vld [vmem:[#allocation10 + $0x300] sm:$0xff]
    %v2326 = vld [vmem:[#allocation10 + $0x308] sm:$0xff]
    %v2327 = vld [vmem:[#allocation10 + $0x310] sm:$0xff]
    %v2328 = vld [vmem:[#allocation10 + $0x318] sm:$0xff]
    %v2329 = vld [vmem:[#allocation10 + $0x320] sm:$0xff]
    %v2330 = vld [vmem:[#allocation10 + $0x328] sm:$0xff]
    %v2331 = vld [vmem:[#allocation10 + $0x330] sm:$0xff]
    %v2332 = vld [vmem:[#allocation10 + $0x338] sm:$0xff]
    %v2333 = vld [vmem:[#allocation10 + $0x340] sm:$0xff]
    %v2334 = vld [vmem:[#allocation10 + $0x348] sm:$0xff]
    %v2335 = vld [vmem:[#allocation10 + $0x350] sm:$0xff]
    %v2336 = vld [vmem:[#allocation10 + $0x358] sm:$0xff]
    %v2337 = vld [vmem:[#allocation10 + $0x360] sm:$0xff]
    %v2338 = vld [vmem:[#allocation10 + $0x368] sm:$0xff]
    %v2339 = vld [vmem:[#allocation10 + $0x370] sm:$0xff]
    %v2340 = vld [vmem:[#allocation10 + $0x378] sm:$0xff]
    %v2341 = vld [vmem:[#allocation10 + $0x380] sm:$0xff]
    %v2342 = vld [vmem:[#allocation10 + $0x388] sm:$0xff]
    %v2343 = vld [vmem:[#allocation10 + $0x390] sm:$0xff]
    %v2344 = vld [vmem:[#allocation10 + $0x398] sm:$0xff]
    %v2345 = vld [vmem:[#allocation10 + $0x3a0] sm:$0xff]
    %v2346 = vld [vmem:[#allocation10 + $0x3a8] sm:$0xff]
    %v2347 = vld [vmem:[#allocation10 + $0x3b0] sm:$0xff]
    %v2348 = vld [vmem:[#allocation10 + $0x3b8] sm:$0xff]
    %v2349 = vld [vmem:[#allocation10 + $0x3c0] sm:$0xff]
    %v2350 = vld [vmem:[#allocation10 + $0x3c8] sm:$0xff]
    %v2351 = vld [vmem:[#allocation10 + $0x3d0] sm:$0xff]
    %v2352 = vld [vmem:[#allocation10 + $0x3d8] sm:$0xff]
    %v2353 = vld [vmem:[#allocation10 + $0x3e0] sm:$0xff]
    %v2354 = vld [vmem:[#allocation10 + $0x3e8] sm:$0xff]
    %v2355 = vld [vmem:[#allocation10 + $0x3f0] sm:$0xff]
    %v2356 = vld [vmem:[#allocation10 + $0x3f8] sm:$0xff]
    %v2357 = vld [vmem:[%s8] sm:$0xf]
    %v2359 = vlaneseq
    %v2360 = vshrl.u32 %v2359, 7
    %v2361 = vsub.s32 0, %v2360
    %v2362 = vrot.slane %v2357, %v2361
    %v2363 = vlaneseq
    %v2364 = vshrl.u32 %v2363, 7
    %v2365 = vsub.s32 1, %v2364
    %v2366 = vrot.slane %v2357, %v2365
    %v2367 = vlaneseq
    %v2368 = vshrl.u32 %v2367, 7
    %v2369 = vsub.s32 2, %v2368
    %v2370 = vrot.slane %v2357, %v2369
    %v2371 = vlaneseq
    %v2372 = vshrl.u32 %v2371, 7
    %v2373 = vsub.s32 3, %v2372
    %v2374 = vrot.slane %v2357, %v2373
    %v2507 = vunpack.c.l.b16 %v2229
    %v2508 = vunpack.c.h.b16 %v2229
    %v2509 = vunpack.c.l.b16 %v2230
    %v2510 = vunpack.c.h.b16 %v2230
    %v2511 = vunpack.c.l.b16 %v2231
    %v2512 = vunpack.c.h.b16 %v2231
    %v2513 = vunpack.c.l.b16 %v2232
    %v2514 = vunpack.c.h.b16 %v2232
    %v2515 = vunpack.c.l.b16 %v2233
    %v2516 = vunpack.c.h.b16 %v2233
    %v2517 = vunpack.c.l.b16 %v2234
    %v2518 = vunpack.c.h.b16 %v2234
    %v2519 = vunpack.c.l.b16 %v2235
    %v2520 = vunpack.c.h.b16 %v2235
    %v2521 = vunpack.c.l.b16 %v2236
    %v2522 = vunpack.c.h.b16 %v2236
    %v2523 = vunpack.c.l.b16 %v2237
    %v2524 = vunpack.c.h.b16 %v2237
    %v2525 = vunpack.c.l.b16 %v2238
    %v2526 = vunpack.c.h.b16 %v2238
    %v2527 = vunpack.c.l.b16 %v2239
    %v2528 = vunpack.c.h.b16 %v2239
    %v2529 = vunpack.c.l.b16 %v2240
    %v2530 = vunpack.c.h.b16 %v2240
    %v2531 = vunpack.c.l.b16 %v2241
    %v2532 = vunpack.c.h.b16 %v2241
    %v2533 = vunpack.c.l.b16 %v2242
    %v2534 = vunpack.c.h.b16 %v2242
    %v2535 = vunpack.c.l.b16 %v2243
    %v2536 = vunpack.c.h.b16 %v2243
    %v2537 = vunpack.c.l.b16 %v2244
    %v2538 = vunpack.c.h.b16 %v2244
    %v2539 = vunpack.c.l.b16 %v2245
    %v2540 = vunpack.c.h.b16 %v2245
    %v2541 = vunpack.c.l.b16 %v2246
    %v2542 = vunpack.c.h.b16 %v2246
    %v2543 = vunpack.c.l.b16 %v2247
    %v2544 = vunpack.c.h.b16 %v2247
    %v2545 = vunpack.c.l.b16 %v2248
    %v2546 = vunpack.c.h.b16 %v2248
    %v2547 = vunpack.c.l.b16 %v2249
    %v2548 = vunpack.c.h.b16 %v2249
    %v2549 = vunpack.c.l.b16 %v2250
    %v2550 = vunpack.c.h.b16 %v2250
    %v2551 = vunpack.c.l.b16 %v2251
    %v2552 = vunpack.c.h.b16 %v2251
    %v2553 = vunpack.c.l.b16 %v2252
    %v2554 = vunpack.c.h.b16 %v2252
    %v2555 = vunpack.c.l.b16 %v2253
    %v2556 = vunpack.c.h.b16 %v2253
    %v2557 = vunpack.c.l.b16 %v2254
    %v2558 = vunpack.c.h.b16 %v2254
    %v2559 = vunpack.c.l.b16 %v2255
    %v2560 = vunpack.c.h.b16 %v2255
    %v2561 = vunpack.c.l.b16 %v2256
    %v2562 = vunpack.c.h.b16 %v2256
    %v2563 = vunpack.c.l.b16 %v2257
    %v2564 = vunpack.c.h.b16 %v2257
    %v2565 = vunpack.c.l.b16 %v2258
    %v2566 = vunpack.c.h.b16 %v2258
    %v2567 = vunpack.c.l.b16 %v2259
    %v2568 = vunpack.c.h.b16 %v2259
    %v2569 = vunpack.c.l.b16 %v2260
    %v2570 = vunpack.c.h.b16 %v2260
    %v2571 = vunpack.c.l.b16 %v2261
    %v2572 = vunpack.c.h.b16 %v2261
    %v2573 = vunpack.c.l.b16 %v2262
    %v2574 = vunpack.c.h.b16 %v2262
    %v2575 = vunpack.c.l.b16 %v2263
    %v2576 = vunpack.c.h.b16 %v2263
    %v2577 = vunpack.c.l.b16 %v2264
    %v2578 = vunpack.c.h.b16 %v2264
    %v2579 = vunpack.c.l.b16 %v2265
    %v2580 = vunpack.c.h.b16 %v2265
    %v2581 = vunpack.c.l.b16 %v2266
    %v2582 = vunpack.c.h.b16 %v2266
    %v2583 = vunpack.c.l.b16 %v2267
    %v2584 = vunpack.c.h.b16 %v2267
    %v2585 = vunpack.c.l.b16 %v2268
    %v2586 = vunpack.c.h.b16 %v2268
    %v2587 = vunpack.c.l.b16 %v2269
    %v2588 = vunpack.c.h.b16 %v2269
    %v2589 = vunpack.c.l.b16 %v2270
    %v2590 = vunpack.c.h.b16 %v2270
    %v2591 = vunpack.c.l.b16 %v2271
    %v2592 = vunpack.c.h.b16 %v2271
    %v2593 = vunpack.c.l.b16 %v2272
    %v2594 = vunpack.c.h.b16 %v2272
    %v2595 = vunpack.c.l.b16 %v2273
    %v2596 = vunpack.c.h.b16 %v2273
    %v2597 = vunpack.c.l.b16 %v2274
    %v2598 = vunpack.c.h.b16 %v2274
    %v2599 = vunpack.c.l.b16 %v2275
    %v2600 = vunpack.c.h.b16 %v2275
    %v2601 = vunpack.c.l.b16 %v2276
    %v2602 = vunpack.c.h.b16 %v2276
    %v2603 = vunpack.c.l.b16 %v2277
    %v2604 = vunpack.c.h.b16 %v2277
    %v2605 = vunpack.c.l.b16 %v2278
    %v2606 = vunpack.c.h.b16 %v2278
    %v2607 = vunpack.c.l.b16 %v2279
    %v2608 = vunpack.c.h.b16 %v2279
    %v2609 = vunpack.c.l.b16 %v2280
    %v2610 = vunpack.c.h.b16 %v2280
    %v2611 = vunpack.c.l.b16 %v2281
    %v2612 = vunpack.c.h.b16 %v2281
    %v2613 = vunpack.c.l.b16 %v2282
    %v2614 = vunpack.c.h.b16 %v2282
    %v2615 = vunpack.c.l.b16 %v2283
    %v2616 = vunpack.c.h.b16 %v2283
    %v2617 = vunpack.c.l.b16 %v2284
    %v2618 = vunpack.c.h.b16 %v2284
    %v2619 = vunpack.c.l.b16 %v2285
    %v2620 = vunpack.c.h.b16 %v2285
    %v2621 = vunpack.c.l.b16 %v2286
    %v2622 = vunpack.c.h.b16 %v2286
    %v2623 = vunpack.c.l.b16 %v2287
    %v2624 = vunpack.c.h.b16 %v2287
    %v2625 = vunpack.c.l.b16 %v2288
    %v2626 = vunpack.c.h.b16 %v2288
    %v2627 = vunpack.c.l.b16 %v2289
    %v2628 = vunpack.c.h.b16 %v2289
    %v2629 = vunpack.c.l.b16 %v2290
    %v2630 = vunpack.c.h.b16 %v2290
    %v2631 = vunpack.c.l.b16 %v2291
    %v2632 = vunpack.c.h.b16 %v2291
    %v2633 = vunpack.c.l.b16 %v2292
    %v2634 = vunpack.c.h.b16 %v2292
    %v2635 = vunpack.c.l.b16 %v2293
    %v2636 = vunpack.c.h.b16 %v2293
    %v2637 = vunpack.c.l.b16 %v2294
    %v2638 = vunpack.c.h.b16 %v2294
    %v2639 = vunpack.c.l.b16 %v2295
    %v2640 = vunpack.c.h.b16 %v2295
    %v2641 = vunpack.c.l.b16 %v2296
    %v2642 = vunpack.c.h.b16 %v2296
    %v2643 = vunpack.c.l.b16 %v2297
    %v2644 = vunpack.c.h.b16 %v2297
    %v2645 = vunpack.c.l.b16 %v2298
    %v2646 = vunpack.c.h.b16 %v2298
    %v2647 = vunpack.c.l.b16 %v2299
    %v2648 = vunpack.c.h.b16 %v2299
    %v2649 = vunpack.c.l.b16 %v2300
    %v2650 = vunpack.c.h.b16 %v2300
    %v2651 = vunpack.c.l.b16 %v2301
    %v2652 = vunpack.c.h.b16 %v2301
    %v2653 = vunpack.c.l.b16 %v2302
    %v2654 = vunpack.c.h.b16 %v2302
    %v2655 = vunpack.c.l.b16 %v2303
    %v2656 = vunpack.c.h.b16 %v2303
    %v2657 = vunpack.c.l.b16 %v2304
    %v2658 = vunpack.c.h.b16 %v2304
    %v2659 = vunpack.c.l.b16 %v2305
    %v2660 = vunpack.c.h.b16 %v2305
    %v2661 = vunpack.c.l.b16 %v2306
    %v2662 = vunpack.c.h.b16 %v2306
    %v2663 = vunpack.c.l.b16 %v2307
    %v2664 = vunpack.c.h.b16 %v2307
    %v2665 = vunpack.c.l.b16 %v2308
    %v2666 = vunpack.c.h.b16 %v2308
    %v2667 = vunpack.c.l.b16 %v2309
    %v2668 = vunpack.c.h.b16 %v2309
    %v2669 = vunpack.c.l.b16 %v2310
    %v2670 = vunpack.c.h.b16 %v2310
    %v2671 = vunpack.c.l.b16 %v2311
    %v2672 = vunpack.c.h.b16 %v2311
    %v2673 = vunpack.c.l.b16 %v2312
    %v2674 = vunpack.c.h.b16 %v2312
    %v2675 = vunpack.c.l.b16 %v2313
    %v2676 = vunpack.c.h.b16 %v2313
    %v2677 = vunpack.c.l.b16 %v2314
    %v2678 = vunpack.c.h.b16 %v2314
    %v2679 = vunpack.c.l.b16 %v2315
    %v2680 = vunpack.c.h.b16 %v2315
    %v2681 = vunpack.c.l.b16 %v2316
    %v2682 = vunpack.c.h.b16 %v2316
    %v2683 = vunpack.c.l.b16 %v2317
    %v2684 = vunpack.c.h.b16 %v2317
    %v2685 = vunpack.c.l.b16 %v2318
    %v2686 = vunpack.c.h.b16 %v2318
    %v2687 = vunpack.c.l.b16 %v2319
    %v2688 = vunpack.c.h.b16 %v2319
    %v2689 = vunpack.c.l.b16 %v2320
    %v2690 = vunpack.c.h.b16 %v2320
    %v2691 = vunpack.c.l.b16 %v2321
    %v2692 = vunpack.c.h.b16 %v2321
    %v2693 = vunpack.c.l.b16 %v2322
    %v2694 = vunpack.c.h.b16 %v2322
    %v2695 = vunpack.c.l.b16 %v2323
    %v2696 = vunpack.c.h.b16 %v2323
    %v2697 = vunpack.c.l.b16 %v2324
    %v2698 = vunpack.c.h.b16 %v2324
    %v2699 = vunpack.c.l.b16 %v2325
    %v2700 = vunpack.c.h.b16 %v2325
    %v2701 = vunpack.c.l.b16 %v2326
    %v2702 = vunpack.c.h.b16 %v2326
    %v2703 = vunpack.c.l.b16 %v2327
    %v2704 = vunpack.c.h.b16 %v2327
    %v2705 = vunpack.c.l.b16 %v2328
    %v2706 = vunpack.c.h.b16 %v2328
    %v2707 = vunpack.c.l.b16 %v2329
    %v2708 = vunpack.c.h.b16 %v2329
    %v2709 = vunpack.c.l.b16 %v2330
    %v2710 = vunpack.c.h.b16 %v2330
    %v2711 = vunpack.c.l.b16 %v2331
    %v2712 = vunpack.c.h.b16 %v2331
    %v2713 = vunpack.c.l.b16 %v2332
    %v2714 = vunpack.c.h.b16 %v2332
    %v2715 = vunpack.c.l.b16 %v2333
    %v2716 = vunpack.c.h.b16 %v2333
    %v2717 = vunpack.c.l.b16 %v2334
    %v2718 = vunpack.c.h.b16 %v2334
    %v2719 = vunpack.c.l.b16 %v2335
    %v2720 = vunpack.c.h.b16 %v2335
    %v2721 = vunpack.c.l.b16 %v2336
    %v2722 = vunpack.c.h.b16 %v2336
    %v2723 = vunpack.c.l.b16 %v2337
    %v2724 = vunpack.c.h.b16 %v2337
    %v2725 = vunpack.c.l.b16 %v2338
    %v2726 = vunpack.c.h.b16 %v2338
    %v2727 = vunpack.c.l.b16 %v2339
    %v2728 = vunpack.c.h.b16 %v2339
    %v2729 = vunpack.c.l.b16 %v2340
    %v2730 = vunpack.c.h.b16 %v2340
    %v2731 = vunpack.c.l.b16 %v2341
    %v2732 = vunpack.c.h.b16 %v2341
    %v2733 = vunpack.c.l.b16 %v2342
    %v2734 = vunpack.c.h.b16 %v2342
    %v2735 = vunpack.c.l.b16 %v2343
    %v2736 = vunpack.c.h.b16 %v2343
    %v2737 = vunpack.c.l.b16 %v2344
    %v2738 = vunpack.c.h.b16 %v2344
    %v2739 = vunpack.c.l.b16 %v2345
    %v2740 = vunpack.c.h.b16 %v2345
    %v2741 = vunpack.c.l.b16 %v2346
    %v2742 = vunpack.c.h.b16 %v2346
    %v2743 = vunpack.c.l.b16 %v2347
    %v2744 = vunpack.c.h.b16 %v2347
    %v2745 = vunpack.c.l.b16 %v2348
    %v2746 = vunpack.c.h.b16 %v2348
    %v2747 = vunpack.c.l.b16 %v2349
    %v2748 = vunpack.c.h.b16 %v2349
    %v2749 = vunpack.c.l.b16 %v2350
    %v2750 = vunpack.c.h.b16 %v2350
    %v2751 = vunpack.c.l.b16 %v2351
    %v2752 = vunpack.c.h.b16 %v2351
    %v2753 = vunpack.c.l.b16 %v2352
    %v2754 = vunpack.c.h.b16 %v2352
    %v2755 = vunpack.c.l.b16 %v2353
    %v2756 = vunpack.c.h.b16 %v2353
    %v2757 = vunpack.c.l.b16 %v2354
    %v2758 = vunpack.c.h.b16 %v2354
    %v2759 = vunpack.c.l.b16 %v2355
    %v2760 = vunpack.c.h.b16 %v2355
    %v2761 = vunpack.c.l.b16 %v2356
    %v2762 = vunpack.c.h.b16 %v2356
    %v2763 = vpack.c.b16 %v2511, %v2507
    %v2764 = vpack.c.b16 %v2512, %v2508
    %v2765 = vpack.c.b16 %v2513, %v2509
    %v2766 = vpack.c.b16 %v2514, %v2510
    %v2767 = vpack.c.b16 %v2519, %v2515
    %v2768 = vpack.c.b16 %v2520, %v2516
    %v2769 = vpack.c.b16 %v2521, %v2517
    %v2770 = vpack.c.b16 %v2522, %v2518
    %v2771 = vpack.c.b16 %v2527, %v2523
    %v2772 = vpack.c.b16 %v2528, %v2524
    %v2773 = vpack.c.b16 %v2529, %v2525
    %v2774 = vpack.c.b16 %v2530, %v2526
    %v2775 = vpack.c.b16 %v2535, %v2531
    %v2776 = vpack.c.b16 %v2536, %v2532
    %v2777 = vpack.c.b16 %v2537, %v2533
    %v2778 = vpack.c.b16 %v2538, %v2534
    %v2779 = vpack.c.b16 %v2543, %v2539
    %v2780 = vpack.c.b16 %v2544, %v2540
    %v2781 = vpack.c.b16 %v2545, %v2541
    %v2782 = vpack.c.b16 %v2546, %v2542
    %v2783 = vpack.c.b16 %v2551, %v2547
    %v2784 = vpack.c.b16 %v2552, %v2548
    %v2785 = vpack.c.b16 %v2553, %v2549
    %v2786 = vpack.c.b16 %v2554, %v2550
    %v2787 = vpack.c.b16 %v2559, %v2555
    %v2788 = vpack.c.b16 %v2560, %v2556
    %v2789 = vpack.c.b16 %v2561, %v2557
    %v2790 = vpack.c.b16 %v2562, %v2558
    %v2791 = vpack.c.b16 %v2567, %v2563
    %v2792 = vpack.c.b16 %v2568, %v2564
    %v2793 = vpack.c.b16 %v2569, %v2565
    %v2794 = vpack.c.b16 %v2570, %v2566
    %v2795 = vpack.c.b16 %v2575, %v2571
    %v2796 = vpack.c.b16 %v2576, %v2572
    %v2797 = vpack.c.b16 %v2577, %v2573
    %v2798 = vpack.c.b16 %v2578, %v2574
    %v2799 = vpack.c.b16 %v2583, %v2579
    %v2800 = vpack.c.b16 %v2584, %v2580
    %v2801 = vpack.c.b16 %v2585, %v2581
    %v2802 = vpack.c.b16 %v2586, %v2582
    %v2803 = vpack.c.b16 %v2591, %v2587
    %v2804 = vpack.c.b16 %v2592, %v2588
    %v2805 = vpack.c.b16 %v2593, %v2589
    %v2806 = vpack.c.b16 %v2594, %v2590
    %v2807 = vpack.c.b16 %v2599, %v2595
    %v2808 = vpack.c.b16 %v2600, %v2596
    %v2809 = vpack.c.b16 %v2601, %v2597
    %v2810 = vpack.c.b16 %v2602, %v2598
    %v2811 = vpack.c.b16 %v2607, %v2603
    %v2812 = vpack.c.b16 %v2608, %v2604
    %v2813 = vpack.c.b16 %v2609, %v2605
    %v2814 = vpack.c.b16 %v2610, %v2606
    %v2815 = vpack.c.b16 %v2615, %v2611
    %v2816 = vpack.c.b16 %v2616, %v2612
    %v2817 = vpack.c.b16 %v2617, %v2613
    %v2818 = vpack.c.b16 %v2618, %v2614
    %v2819 = vpack.c.b16 %v2623, %v2619
    %v2820 = vpack.c.b16 %v2624, %v2620
    %v2821 = vpack.c.b16 %v2625, %v2621
    %v2822 = vpack.c.b16 %v2626, %v2622
    %v2823 = vpack.c.b16 %v2631, %v2627
    %v2824 = vpack.c.b16 %v2632, %v2628
    %v2825 = vpack.c.b16 %v2633, %v2629
    %v2826 = vpack.c.b16 %v2634, %v2630
    %v2827 = vpack.c.b16 %v2639, %v2635
    %v2828 = vpack.c.b16 %v2640, %v2636
    %v2829 = vpack.c.b16 %v2641, %v2637
    %v2830 = vpack.c.b16 %v2642, %v2638
    %v2831 = vpack.c.b16 %v2647, %v2643
    %v2832 = vpack.c.b16 %v2648, %v2644
    %v2833 = vpack.c.b16 %v2649, %v2645
    %v2834 = vpack.c.b16 %v2650, %v2646
    %v2835 = vpack.c.b16 %v2655, %v2651
    %v2836 = vpack.c.b16 %v2656, %v2652
    %v2837 = vpack.c.b16 %v2657, %v2653
    %v2838 = vpack.c.b16 %v2658, %v2654
    %v2839 = vpack.c.b16 %v2663, %v2659
    %v2840 = vpack.c.b16 %v2664, %v2660
    %v2841 = vpack.c.b16 %v2665, %v2661
    %v2842 = vpack.c.b16 %v2666, %v2662
    %v2843 = vpack.c.b16 %v2671, %v2667
    %v2844 = vpack.c.b16 %v2672, %v2668
    %v2845 = vpack.c.b16 %v2673, %v2669
    %v2846 = vpack.c.b16 %v2674, %v2670
    %v2847 = vpack.c.b16 %v2679, %v2675
    %v2848 = vpack.c.b16 %v2680, %v2676
    %v2849 = vpack.c.b16 %v2681, %v2677
    %v2850 = vpack.c.b16 %v2682, %v2678
    %v2851 = vpack.c.b16 %v2687, %v2683
    %v2852 = vpack.c.b16 %v2688, %v2684
    %v2853 = vpack.c.b16 %v2689, %v2685
    %v2854 = vpack.c.b16 %v2690, %v2686
    %v2855 = vpack.c.b16 %v2695, %v2691
    %v2856 = vpack.c.b16 %v2696, %v2692
    %v2857 = vpack.c.b16 %v2697, %v2693
    %v2858 = vpack.c.b16 %v2698, %v2694
    %v2859 = vpack.c.b16 %v2703, %v2699
    %v2860 = vpack.c.b16 %v2704, %v2700
    %v2861 = vpack.c.b16 %v2705, %v2701
    %v2862 = vpack.c.b16 %v2706, %v2702
    %v2863 = vpack.c.b16 %v2711, %v2707
    %v2864 = vpack.c.b16 %v2712, %v2708
    %v2865 = vpack.c.b16 %v2713, %v2709
    %v2866 = vpack.c.b16 %v2714, %v2710
    %v2867 = vpack.c.b16 %v2719, %v2715
    %v2868 = vpack.c.b16 %v2720, %v2716
    %v2869 = vpack.c.b16 %v2721, %v2717
    %v2870 = vpack.c.b16 %v2722, %v2718
    %v2871 = vpack.c.b16 %v2727, %v2723
    %v2872 = vpack.c.b16 %v2728, %v2724
    %v2873 = vpack.c.b16 %v2729, %v2725
    %v2874 = vpack.c.b16 %v2730, %v2726
    %v2875 = vpack.c.b16 %v2735, %v2731
    %v2876 = vpack.c.b16 %v2736, %v2732
    %v2877 = vpack.c.b16 %v2737, %v2733
    %v2878 = vpack.c.b16 %v2738, %v2734
    %v2879 = vpack.c.b16 %v2743, %v2739
    %v2880 = vpack.c.b16 %v2744, %v2740
    %v2881 = vpack.c.b16 %v2745, %v2741
    %v2882 = vpack.c.b16 %v2746, %v2742
    %v2883 = vpack.c.b16 %v2751, %v2747
    %v2884 = vpack.c.b16 %v2752, %v2748
    %v2885 = vpack.c.b16 %v2753, %v2749
    %v2886 = vpack.c.b16 %v2754, %v2750
    %v2887 = vpack.c.b16 %v2759, %v2755
    %v2888 = vpack.c.b16 %v2760, %v2756
    %v2889 = vpack.c.b16 %v2761, %v2757
    %v2890 = vpack.c.b16 %v2762, %v2758
    %3019 = vmatprep.subr.bf16.mxu0 %v2764
    %3020 = vmatpush1.bf16.msra.mxu0 %v2763
    %3021 = vmatprep.subr.bf16.mxu0 %v2768
    %3022 = vmatpush1.bf16.msra.mxu0 %v2767
    %3023 = vmatprep.subr.bf16.mxu0 %v2772
    %3024 = vmatpush1.bf16.msra.mxu0 %v2771
    %3025 = vmatprep.subr.bf16.mxu0 %v2776
    %3026 = vmatpush1.bf16.msra.mxu0 %v2775
    %3027 = vmatprep.subr.bf16.mxu0 %v2780
    %3028 = vmatpush1.bf16.msra.mxu0 %v2779
    %3029 = vmatprep.subr.bf16.mxu0 %v2784
    %3030 = vmatpush1.bf16.msra.mxu0 %v2783
    %3031 = vmatprep.subr.bf16.mxu0 %v2788
    %3032 = vmatpush1.bf16.msra.mxu0 %v2787
    %3033 = vmatprep.subr.bf16.mxu0 %v2792
    %3034 = vmatpush1.bf16.msra.mxu0 %v2791
    %3035 = vmatprep.subr.bf16.mxu0 %v2796
    %3036 = vmatpush1.bf16.msra.mxu0 %v2795
    %3037 = vmatprep.subr.bf16.mxu0 %v2800
    %3038 = vmatpush1.bf16.msra.mxu0 %v2799
    %3039 = vmatprep.subr.bf16.mxu0 %v2804
    %3040 = vmatpush1.bf16.msra.mxu0 %v2803
    %3041 = vmatprep.subr.bf16.mxu0 %v2808
    %3042 = vmatpush1.bf16.msra.mxu0 %v2807
    %3043 = vmatprep.subr.bf16.mxu0 %v2812
    %3044 = vmatpush1.bf16.msra.mxu0 %v2811
    %3045 = vmatprep.subr.bf16.mxu0 %v2816
    %3046 = vmatpush1.bf16.msra.mxu0 %v2815
    %3047 = vmatprep.subr.bf16.mxu0 %v2820
    %3048 = vmatpush1.bf16.msra.mxu0 %v2819
    %3049 = vmatprep.subr.bf16.mxu0 %v2824
    %3050 = vmatpush1.bf16.msra.mxu0 %v2823
    %3051 = vmatprep.mubr.bf16.mxu0 %v2226
    %3052 = vmatmul.mubr.bf16.gmra.mrb[0].mxu0 %v2225
    %v3053 = vpop.f32.mrb[0].mxu0
    %v3054 = vadd.f32 %v2362, %v3053
    %v3055 = vpop.f32.mrb[0].mxu0
    %v3056 = vadd.f32 %v2366, %v3055
    %v3057 = vpop.f32.mrb[0].mxu0
    %v3058 = vadd.f32 %v2362, %v3057
    %v3059 = vpop.f32.mrb[0].mxu0
    %v3060 = vadd.f32 %v2366, %v3059
    %3061 = vdwg.mxu0
    %3062 = vmatprep.subr.bf16.mxu0 %v2828
    %3063 = vmatpush1.bf16.msra.mxu0 %v2827
    %3064 = vmatprep.subr.bf16.mxu0 %v2832
    %3065 = vmatpush1.bf16.msra.mxu0 %v2831
    %3066 = vmatprep.subr.bf16.mxu0 %v2836
    %3067 = vmatpush1.bf16.msra.mxu0 %v2835
    %3068 = vmatprep.subr.bf16.mxu0 %v2840
    %3069 = vmatpush1.bf16.msra.mxu0 %v2839
    %3070 = vmatprep.subr.bf16.mxu0 %v2844
    %3071 = vmatpush1.bf16.msra.mxu0 %v2843
    %3072 = vmatprep.subr.bf16.mxu0 %v2848
    %3073 = vmatpush1.bf16.msra.mxu0 %v2847
    %3074 = vmatprep.subr.bf16.mxu0 %v2852
    %3075 = vmatpush1.bf16.msra.mxu0 %v2851
    %3076 = vmatprep.subr.bf16.mxu0 %v2856
    %3077 = vmatpush1.bf16.msra.mxu0 %v2855
    %3078 = vmatprep.subr.bf16.mxu0 %v2860
    %3079 = vmatpush1.bf16.msra.mxu0 %v2859
    %3080 = vmatprep.subr.bf16.mxu0 %v2864
    %3081 = vmatpush1.bf16.msra.mxu0 %v2863
    %3082 = vmatprep.subr.bf16.mxu0 %v2868
    %3083 = vmatpush1.bf16.msra.mxu0 %v2867
    %3084 = vmatprep.subr.bf16.mxu0 %v2872
    %3085 = vmatpush1.bf16.msra.mxu0 %v2871
    %3086 = vmatprep.subr.bf16.mxu0 %v2876
    %3087 = vmatpush1.bf16.msra.mxu0 %v2875
    %3088 = vmatprep.subr.bf16.mxu0 %v2880
    %3089 = vmatpush1.bf16.msra.mxu0 %v2879
    %3090 = vmatprep.subr.bf16.mxu0 %v2884
    %3091 = vmatpush1.bf16.msra.mxu0 %v2883
    %3092 = vmatprep.subr.bf16.mxu0 %v2888
    %3093 = vmatpush1.bf16.msra.mxu0 %v2887
    %3094 = vmatprep.mubr.bf16.mxu0 %v2228
    %3095 = vmatmul.mubr.bf16.gmra.mrb[0].mxu0 %v2227
    %v3096 = vpop.f32.mrb[0].mxu0
    %v3097 = vadd.f32 %v3054, %v3096
    %v3098 = vpop.f32.mrb[0].mxu0
    %v3099 = vadd.f32 %v3056, %v3098
    %v3100 = vpop.f32.mrb[0].mxu0
    %v3101 = vadd.f32 %v3058, %v3100
    %v3102 = vpop.f32.mrb[0].mxu0
    %v3103 = vadd.f32 %v3060, %v3102
    %3104 = vdwg.mxu0
    %3105 = vmatprep.subr.bf16.mxu0 %v2766
    %3106 = vmatpush1.bf16.msra.mxu0 %v2765
    %3107 = vmatprep.subr.bf16.mxu0 %v2770
    %3108 = vmatpush1.bf16.msra.mxu0 %v2769
    %3109 = vmatprep.subr.bf16.mxu0 %v2774
    %3110 = vmatpush1.bf16.msra.mxu0 %v2773
    %3111 = vmatprep.subr.bf16.mxu0 %v2778
    %3112 = vmatpush1.bf16.msra.mxu0 %v2777
    %3113 = vmatprep.subr.bf16.mxu0 %v2782
    %3114 = vmatpush1.bf16.msra.mxu0 %v2781
    %3115 = vmatprep.subr.bf16.mxu0 %v2786
    %3116 = vmatpush1.bf16.msra.mxu0 %v2785
    %3117 = vmatprep.subr.bf16.mxu0 %v2790
    %3118 = vmatpush1.bf16.msra.mxu0 %v2789
    %3119 = vmatprep.subr.bf16.mxu0 %v2794
    %3120 = vmatpush1.bf16.msra.mxu0 %v2793
    %3121 = vmatprep.subr.bf16.mxu0 %v2798
    %3122 = vmatpush1.bf16.msra.mxu0 %v2797
    %3123 = vmatprep.subr.bf16.mxu0 %v2802
    %3124 = vmatpush1.bf16.msra.mxu0 %v2801
    %3125 = vmatprep.subr.bf16.mxu0 %v2806
    %3126 = vmatpush1.bf16.msra.mxu0 %v2805
    %3127 = vmatprep.subr.bf16.mxu0 %v2810
    %3128 = vmatpush1.bf16.msra.mxu0 %v2809
    %3129 = vmatprep.subr.bf16.mxu0 %v2814
    %3130 = vmatpush1.bf16.msra.mxu0 %v2813
    %3131 = vmatprep.subr.bf16.mxu0 %v2818
    %3132 = vmatpush1.bf16.msra.mxu0 %v2817
    %3133 = vmatprep.subr.bf16.mxu0 %v2822
    %3134 = vmatpush1.bf16.msra.mxu0 %v2821
    %3135 = vmatprep.subr.bf16.mxu0 %v2826
    %3136 = vmatpush1.bf16.msra.mxu0 %v2825
    %3137 = vmatprep.mubr.bf16.mxu0 %v2226
    %3138 = vmatmul.mubr.bf16.gmra.mrb[0].mxu0 %v2225
    %v3139 = vpop.f32.mrb[0].mxu0
    %v3140 = vadd.f32 %v2370, %v3139
    %v3141 = vpop.f32.mrb[0].mxu0
    %v3142 = vadd.f32 %v2374, %v3141
    %v3143 = vpop.f32.mrb[0].mxu0
    %v3144 = vadd.f32 %v2370, %v3143
    %v3145 = vpop.f32.mrb[0].mxu0
    %v3146 = vadd.f32 %v2374, %v3145
    %3147 = vdwg.mxu0
    %3148 = vmatprep.subr.bf16.mxu0 %v2830
    %3149 = vmatpush1.bf16.msra.mxu0 %v2829
    %3150 = vmatprep.subr.bf16.mxu0 %v2834
    %3151 = vmatpush1.bf16.msra.mxu0 %v2833
    %3152 = vmatprep.subr.bf16.mxu0 %v2838
    %3153 = vmatpush1.bf16.msra.mxu0 %v2837
    %3154 = vmatprep.subr.bf16.mxu0 %v2842
    %3155 = vmatpush1.bf16.msra.mxu0 %v2841
    %3156 = vmatprep.subr.bf16.mxu0 %v2846
    %3157 = vmatpush1.bf16.msra.mxu0 %v2845
    %3158 = vmatprep.subr.bf16.mxu0 %v2850
    %3159 = vmatpush1.bf16.msra.mxu0 %v2849
    %3160 = vmatprep.subr.bf16.mxu0 %v2854
    %3161 = vmatpush1.bf16.msra.mxu0 %v2853
    %3162 = vmatprep.subr.bf16.mxu0 %v2858
    %3163 = vmatpush1.bf16.msra.mxu0 %v2857
    %3164 = vmatprep.subr.bf16.mxu0 %v2862
    %3165 = vmatpush1.bf16.msra.mxu0 %v2861
    %3166 = vmatprep.subr.bf16.mxu0 %v2866
    %3167 = vmatpush1.bf16.msra.mxu0 %v2865
    %3168 = vmatprep.subr.bf16.mxu0 %v2870
    %3169 = vmatpush1.bf16.msra.mxu0 %v2869
    %3170 = vmatprep.subr.bf16.mxu0 %v2874
    %3171 = vmatpush1.bf16.msra.mxu0 %v2873
    %3172 = vmatprep.subr.bf16.mxu0 %v2878
    %3173 = vmatpush1.bf16.msra.mxu0 %v2877
    %3174 = vmatprep.subr.bf16.mxu0 %v2882
    %3175 = vmatpush1.bf16.msra.mxu0 %v2881
    %3176 = vmatprep.subr.bf16.mxu0 %v2886
    %3177 = vmatpush1.bf16.msra.mxu0 %v2885
    %3178 = vmatprep.subr.bf16.mxu0 %v2890
    %3179 = vmatpush1.bf16.msra.mxu0 %v2889
    %3180 = vmatprep.mubr.bf16.mxu0 %v2228
    %3181 = vmatmul.mubr.bf16.gmra.mrb[0].mxu0 %v2227
    %v3182 = vpop.f32.mrb[0].mxu0
    %v3183 = vadd.f32 %v3140, %v3182
    %v3184 = vpop.f32.mrb[0].mxu0
    %v3185 = vadd.f32 %v3142, %v3184
    %v3186 = vpop.f32.mrb[0].mxu0
    %v3187 = vadd.f32 %v3144, %v3186
    %v3188 = vpop.f32.mrb[0].mxu0
    %v3189 = vadd.f32 %v3146, %v3188
    %3190 = vdwg.mxu0
    %v3191 = vmul.f32 %v3097, 0.01
    %v3192 = vmul.f32 %v3099, 0.01
    %v3193 = vmul.f32 %v3183, 0.01
    %v3194 = vmul.f32 %v3185, 0.01
    %v3195 = vmul.f32 %v3101, 0.01
    %v3196 = vmul.f32 %v3103, 0.01
    %v3197 = vmul.f32 %v3187, 0.01
    %v3198 = vmul.f32 %v3189, 0.01
    %v3199 = vmax.f32 %v3097, %v3191
    %v3200 = vmax.f32 %v3099, %v3192
    %v3201 = vmax.f32 %v3183, %v3193
    %v3202 = vmax.f32 %v3185, %v3194
    %v3203 = vmax.f32 %v3101, %v3195
    %v3204 = vmax.f32 %v3103, %v3196
    %v3205 = vmax.f32 %v3187, %v3197
    %v3206 = vmax.f32 %v3189, %v3198
    %3207 = vst [vmem:[#allocation11] sm:$0xff] %v3199
    %3208 = vst [vmem:[#allocation11 + $0x8] sm:$0xff] %v3200
    %3209 = vst [vmem:[#allocation11 + $0x10] sm:$0xff] %v3201
    %3210 = vst [vmem:[#allocation11 + $0x18] sm:$0xff] %v3202
    %3211 = vst [vmem:[#allocation11 + $0x20] sm:$0xff] %v3203
    %3212 = vst [vmem:[#allocation11 + $0x28] sm:$0xff] %v3204
    %3213 = vst [vmem:[#allocation11 + $0x30] sm:$0xff] %v3205
    %3214 = vst [vmem:[#allocation11 + $0x38] sm:$0xff] %v3206
    // Predicated region
    $region58: #{tpu_custom_call.1} parent=1 // pred_check
      _
    $region59: #{tpu_custom_call.1} parent=1 // pred_check_branch
      %3216 = sbr.rel (0) target = $region61
    $region60: #{tpu_custom_call.1} parent=1 // pred_region
      %s3218 = ssub.s32 1024, 512
      %3219 = vsyncadd [#allocation4], %s3218
      %s3220 = sshll.u32 [#allocation11], 4
      %s3221 = int_to_ptr.vmem [resolvable:$true] %s3220
      %3226 = dma.vmem_to_hbm [thread:$0]  %s3221, 512, %s9, [#allocation4], 512, 512, 32
    $region61: #{tpu_custom_call.1} parent=1 // pred_fallthru
      _
    // Predicated region
    $region62: #{tpu_custom_call.1} parent=1 // pred_check
      _
    $region63: #{tpu_custom_call.1} parent=1 // pred_check_branch
      %3228 = sbr.rel (0) target = $region65
    $region64: #{tpu_custom_call.1} parent=1 // pred_region
      %3229 = dma.done [#allocation4], 1024
    $region65: #{tpu_custom_call.1} parent=1 // pred_fallthru
      _
    %3230 = vsyncpa [#allocation3], 1
    %3231 = vsyncpa [#allocation6], 1
    %3232 = vsyncpa [#allocation9], 1
    %3233 = vsyncpa [#allocation4], 1

</llo_original>
